<compile_context>
chip_gen: v7x
topology: tpu7x:2x2x1
jax: 0.10.0
libtpu: 0.0.40
codegen_flags: <defaults>
</compile_context>

<pallas_src>
import jax
import jax.numpy as jnp
from jax import lax
from jax.experimental import pallas as pl
from jax.experimental.pallas import tpu as pltpu


SUBLANE = 8      # f32 sublane tile
BB_MAX = 256     # largest batch tile a single grid step owns


def _round_up(n, m):
    return ((n + m - 1) // m) * m


# --------------------------------------------------------------------------
# Fused kernel (all layers + pooling + projection)
# --------------------------------------------------------------------------
def make_fused_kernel(n_layers: int, T: int, H: int):
    """Build the fused kernel body for a fixed layer count / sequence length."""

    def kernel(x_ref, *refs):
        # refs = (wih_0, whh_0, b_0, ..., wih_{L-1}, whh_{L-1}, b_{L-1},
        #         wp_mean, wp_max, bp, y_ref, xg_scratch, hseq_scratch)
        layer_refs = refs[: 3 * n_layers]
        wpm_ref, wpx_ref, bp_ref, y_ref, xg_ref, hseq_ref = refs[3 * n_layers:]

        bb = x_ref.shape[1]                               # batch tile

        sum_h = None
        run_max = None
        for layer in range(n_layers):
            wih = layer_refs[3 * layer][...]              # bf16 (F_in, 4H)  cols: i|f|o|g
            whh = layer_refs[3 * layer + 1][...]          # bf16 (H, 4H)
            b = layer_refs[3 * layer + 2][...]            # f32  (1, 4H)

            if layer == 0:
                # time-major (T, bb, F) -> (T*bb, F); MXU operand in bf16.
                lin = x_ref[...].reshape(T * bb, x_ref.shape[2]).astype(jnp.bfloat16)
            else:
                lin = hseq_ref[...].astype(jnp.bfloat16)  # previous layer's hidden seq

            # Hoisted input projection + bias (off the serial critical path),
            # written straight into VMEM scratch.
            xg_ref[...] = (jnp.dot(lin, wih, preferred_element_type=jnp.float32) + b)

            last = layer == n_layers - 1
            c = None
            h_bf = None

            # Fully unrolled recurrence (T is a small compile-time constant).
            # TODO(synk): for large T use lax.fori_loop(unroll=2..4) over xg_ref.
            for t in range(T):
                xg_t = xg_ref[pl.ds(t * bb, bb), :]       # (bb, 4H), bias already folded in
                if t == 0:
                    gates = xg_t                          # h_0 == 0 -> skip recurrent dot
                else:
                    gates = xg_t + jnp.dot(h_bf, whh,
                                           preferred_element_type=jnp.float32)
                s = jax.nn.sigmoid(gates[:, : 3 * H])     # i | f | o : one EUP region
                g = jnp.tanh(gates[:, 3 * H:])            # g
                i_g = s[:, :H]
                f_g = s[:, H:2 * H]
                o_g = s[:, 2 * H:3 * H]
                c = i_g * g if t == 0 else f_g * c + i_g * g     # f32
                h = o_g * jnp.tanh(c)                            # f32
                h_bf = h.astype(jnp.bfloat16)             # next step's MXU operand
                if last:
                    if t == 0:
                        sum_h = h
                        run_max = h
                    else:
                        sum_h = sum_h + h
                        run_max = jnp.maximum(run_max, h)
                else:
                    hseq_ref[pl.ds(t * bb, bb), :] = h    # on-chip handoff to next layer

        # Final projection: mean-pool is folded into wp_mean (pre-scaled 1/T
        # host-side), so no lane-concat and no extra scaling here. Kept f32.
        y_ref[...] = (jnp.dot(sum_h, wpm_ref[...], preferred_element_type=jnp.float32)
                      + jnp.dot(run_max, wpx_ref[...], preferred_element_type=jnp.float32)
                      + bp_ref[...])

    return kernel


# --------------------------------------------------------------------------
# Host-side param prep (done once):
#   * gate-column permutation [i,f,g,o] -> [i,f,o,g]
#   * LSTM weights cast to bf16 (MXU operands); biases stay f32
#   * projection weight split into mean / max branches (f32)
# --------------------------------------------------------------------------
def prepare_params(params):
    layers = []
    for (wih, whh, b) in params["lstm"]:
        H = whh.shape[0]
        perm = jnp.concatenate([jnp.arange(0, H),           # i
                                jnp.arange(H, 2 * H),       # f
                                jnp.arange(3 * H, 4 * H),   # o
                                jnp.arange(2 * H, 3 * H)])  # g
        layers.append((wih[:, perm].astype(jnp.bfloat16),
                       whh[:, perm].astype(jnp.bfloat16),
                       b[:, perm].astype(jnp.float32)))
    wp, bp = params["proj"]
    H = params["lstm"][0][1].shape[0]
    return {"lstm": layers,
            "proj": (wp[:H].astype(jnp.float32),            # mean branch (unscaled)
                     wp[H:].astype(jnp.float32),            # max branch
                     bp.astype(jnp.float32))}


# --------------------------------------------------------------------------
# Wrapper
# --------------------------------------------------------------------------
def lstm_baseline_forward(x, kparams, *, horizon, n_targets):
    """x: (B, T, n_features), batch-first like the PyTorch module.
    kparams: output of prepare_params()."""
    B, T, F = x.shape
    layers = kparams["lstm"]
    wp_mean, wp_max, bp = kparams["proj"]
    n_layers = len(layers)
    H = layers[0][1].shape[0]
    O = wp_mean.shape[1]

    # ---- batch tiling: biggest tile that fits; >= 2 grid steps when possible
    #      so both v7x TensorCores get work (no-op on v5e/v6e).
    B_ceil = _round_up(B, SUBLANE)
    if B_ceil <= SUBLANE:
        BB = SUBLANE                        # can't split below one sublane tile
    else:
        BB = min(BB_MAX, _round_up(pl.cdiv(B_ceil, 2), SUBLANE))
    B_pad = _round_up(B, BB)
    grid = (B_pad // BB,)

    # Time-major relayout + pad batch (zeros; padded rows sliced off at the end).
    x_tb = jnp.transpose(x.astype(jnp.float32), (1, 0, 2))        # (T, B, F)
    if B_pad != B:
        x_tb = jnp.pad(x_tb, ((0, 0), (0, B_pad - B), (0, 0)))

    # Mean pooling folded into the projection weight (host-side pre-scale).
    wp_mean_s = wp_mean * (1.0 / T)

    flat_w = []
    for (wih, whh, b) in layers:
        flat_w += [wih, whh, b]

    def full_spec(a):
        # Whole array resident in VMEM, invariant across grid steps.
        # TODO(synk): pipeline_mode=pl.Buffered(1) for these invariant blocks
        # when H scales and VMEM headroom on v7x (64 MiB/TC) gets tight.
        return pl.BlockSpec(a.shape, lambda i: (0, 0))

    in_specs = [pl.BlockSpec((T, BB, F), lambda i: (0, i, 0))]
    in_specs += [full_spec(a) for a in flat_w]
    in_specs += [full_spec(wp_mean_s), full_spec(wp_max), full_spec(bp)]

    # VMEM budget estimate (+ headroom), capped at the v7x 64 MiB/TC ceiling.
    def nbytes(a):
        return a.size * a.dtype.itemsize
    est = 2 * (T * BB * F * 4)                                   # x block (dbl-buffered)
    est += 2 * (sum(nbytes(a) for a in flat_w)
                + nbytes(wp_mean_s) + nbytes(wp_max) + nbytes(bp))
    est += T * BB * 4 * H * 4 + T * BB * H * 4                   # xg + hseq scratch
    est += 2 * BB * O * 4                                        # output block
    vmem_limit = int(min(max(2 * est, 16 << 20), 64 << 20))

    y = pl.pallas_call(
        make_fused_kernel(n_layers, T, H),
        out_shape=jax.ShapeDtypeStruct((B_pad, O), jnp.float32),
        grid=grid,
        in_specs=in_specs,
        out_specs=pl.BlockSpec((BB, O), lambda i: (i, 0)),
        scratch_shapes=[pltpu.VMEM((T * BB, 4 * H), jnp.float32),   # xg
                        pltpu.VMEM((T * BB, H), jnp.float32)],      # inter-layer hidden seq
        compiler_params=pltpu.CompilerParams(
            dimension_semantics=("parallel",),          # batch tiles across TCs (v7x)
            vmem_limit_bytes=vmem_limit),
    )(x_tb, *flat_w, wp_mean_s, wp_max, bp)

    return y[:B].reshape(B, horizon, n_targets)


# TODO(synk): nn.LSTM inter-layer dropout is train-mode only; this implements
# eval-mode forward semantics (dropout inactive).


# --------------------------------------------------------------------------
# Pure-JAX reference (PyTorch LSTM math, original gate order, f32)
# --------------------------------------------------------------------------
def reference_forward(x, params, horizon, n_targets):
    B, T, _ = x.shape
    h_in = x.astype(jnp.float32)
    for (wih, whh, b) in params["lstm"]:
        H = whh.shape[0]

        def cell(carry, x_t):
            h, c = carry
            gates = x_t @ wih + h @ whh + b[0]
            i_g = jax.nn.sigmoid(gates[:, 0:H])
            f_g = jax.nn.sigmoid(gates[:, H:2 * H])
            g_g = jnp.tanh(gates[:, 2 * H:3 * H])
            o_g = jax.nn.sigmoid(gates[:, 3 * H:4 * H])
            c = f_g * c + i_g * g_g
            h = o_g * jnp.tanh(c)
            return (h, c), h

        init = (jnp.zeros((B, H), jnp.float32), jnp.zeros((B, H), jnp.float32))
        _, hs = lax.scan(cell, init, jnp.transpose(h_in, (1, 0, 2)))
        h_in = jnp.transpose(hs, (1, 0, 2))

    mean_pool = h_in.mean(axis=1)
    max_pool = h_in.max(axis=1)
    context = jnp.concatenate([mean_pool, max_pool], axis=-1)
    wp, bp = params["proj"]
    y = context @ wp + bp[0]
    return y.reshape(B, horizon, n_targets)


# --------------------------------------------------------------------------
# Driver
# --------------------------------------------------------------------------
if __name__ == "__main__":
    B, T = 2, 8
    n_features = 4
    lstm_hidden = 32
    lstm_layers = 2
    horizon, n_targets = 4, 3

    key = jax.random.PRNGKey(0)
    keys = jax.random.split(key, 4 * lstm_layers + 3)

    lstm_params = []
    in_dim = n_features
    k = 0
    for _ in range(lstm_layers):
        wih = 0.1 * jax.random.normal(keys[k], (in_dim, 4 * lstm_hidden), jnp.float32); k += 1
        whh = 0.1 * jax.random.normal(keys[k], (lstm_hidden, 4 * lstm_hidden), jnp.float32); k += 1
        b_ih = 0.1 * jax.random.normal(keys[k], (4 * lstm_hidden,), jnp.float32); k += 1
        b_hh = 0.1 * jax.random.normal(keys[k], (4 * lstm_hidden,), jnp.float32); k += 1
        lstm_params.append((wih, whh, (b_ih + b_hh).reshape(1, -1)))
        in_dim = lstm_hidden

    wp = 0.1 * jax.random.normal(keys[k], (2 * lstm_hidden, horizon * n_targets), jnp.float32); k += 1
    bp = 0.1 * jax.random.normal(keys[k], (1, horizon * n_targets), jnp.float32); k += 1
    x = jax.random.normal(keys[k], (B, T, n_features), jnp.float32)

    params = {"lstm": lstm_params, "proj": (wp, bp)}
    kparams = prepare_params(params)           # gate permute + bf16 cast + wp split

    forward = jax.jit(lstm_baseline_forward,
                      static_argnames=("horizon", "n_targets"))
    y = forward(x, kparams, horizon=horizon, n_targets=n_targets)
    y = jax.block_until_ready(y)

    y_ref = reference_forward(x, params, horizon, n_targets)
    assert y.shape == (B, horizon, n_targets), y.shape
    err = float(jnp.max(jnp.abs(y - y_ref)))
    # Tolerance relaxed vs. the pure-f32 version: MXU operands are bf16
    # (f32 accumulation); reference is full f32.
    assert jnp.allclose(y, y_ref, rtol=5e-2, atol=5e-2), err

    print("KERNEL_OK")
</pallas_src>

<mosaic_0001>
module attributes {stable_mosaic.version = 11 : i64} {
  func.func @kernel(%arg0: i32, %arg1: memref<8x8x4xf32, #tpu.memory_space<vmem>>, %arg2: memref<4x128xbf16, #tpu.memory_space<vmem>>, %arg3: memref<32x128xbf16, #tpu.memory_space<vmem>>, %arg4: memref<1x128xf32, #tpu.memory_space<vmem>>, %arg5: memref<32x128xbf16, #tpu.memory_space<vmem>>, %arg6: memref<32x128xbf16, #tpu.memory_space<vmem>>, %arg7: memref<1x128xf32, #tpu.memory_space<vmem>>, %arg8: memref<32x12xf32, #tpu.memory_space<vmem>>, %arg9: memref<32x12xf32, #tpu.memory_space<vmem>>, %arg10: memref<1x12xf32, #tpu.memory_space<vmem>>, %arg11: memref<8x12xf32, #tpu.memory_space<vmem>>, %arg12: memref<64x128xf32, #tpu.memory_space<vmem>>, %arg13: memref<64x32xf32, #tpu.memory_space<vmem>>) attributes {dimension_semantics = [#tpu.dimension_semantics<parallel>], iteration_bounds = array<i64: 1>, scalar_prefetch = 0 : i64, scratch_operands = 2 : i64, tpu.core_type = #tpu.core_type<tc>, window_params = [{transform_indices = @transform_0, window_bounds = array<i64: 8, 8, 4>}, {pipeline_mode = #tpu.pipeline_mode<synchronous>, transform_indices = @transform_1, window_bounds = array<i64: 4, 128>}, {pipeline_mode = #tpu.pipeline_mode<synchronous>, transform_indices = @transform_2, window_bounds = array<i64: 32, 128>}, {pipeline_mode = #tpu.pipeline_mode<synchronous>, transform_indices = @transform_3, window_bounds = array<i64: 1, 128>}, {pipeline_mode = #tpu.pipeline_mode<synchronous>, transform_indices = @transform_4, window_bounds = array<i64: 32, 128>}, {pipeline_mode = #tpu.pipeline_mode<synchronous>, transform_indices = @transform_5, window_bounds = array<i64: 32, 128>}, {pipeline_mode = #tpu.pipeline_mode<synchronous>, transform_indices = @transform_6, window_bounds = array<i64: 1, 128>}, {pipeline_mode = #tpu.pipeline_mode<synchronous>, transform_indices = @transform_7, window_bounds = array<i64: 32, 12>}, {pipeline_mode = #tpu.pipeline_mode<synchronous>, transform_indices = @transform_8, window_bounds = array<i64: 32, 12>}, {pipeline_mode = #tpu.pipeline_mode<synchronous>, transform_indices = @transform_9, window_bounds = array<i64: 1, 12>}, {transform_indices = @transform_10, window_bounds = array<i64: 8, 12>}]} {
    %c0 = arith.constant 0 : index
    %c0_0 = arith.constant 0 : index
    %0 = vector.load %arg2[%c0, %c0_0] : memref<4x128xbf16, #tpu.memory_space<vmem>>, vector<4x128xbf16>
    %c0_1 = arith.constant 0 : index
    %c0_2 = arith.constant 0 : index
    %1 = vector.load %arg3[%c0_1, %c0_2] : memref<32x128xbf16, #tpu.memory_space<vmem>>, vector<32x128xbf16>
    %c0_3 = arith.constant 0 : index
    %c0_4 = arith.constant 0 : index
    %2 = vector.load %arg4[%c0_3, %c0_4] : memref<1x128xf32, #tpu.memory_space<vmem>>, vector<1x128xf32>
    %c0_5 = arith.constant 0 : index
    %c0_6 = arith.constant 0 : index
    %c0_7 = arith.constant 0 : index
    %3 = vector.load %arg1[%c0_5, %c0_6, %c0_7] : memref<8x8x4xf32, #tpu.memory_space<vmem>>, vector<8x8x4xf32>
    %4 = vector.shape_cast %3 : vector<8x8x4xf32> to vector<64x4xf32>
    %5 = arith.truncf %4 : vector<64x4xf32> to vector<64x4xbf16>
    %cst = arith.constant dense<0.000000e+00> : vector<64x128xf32>
    %6 = tpu.matmul %5, %0, %cst {dimension_numbers = #tpu.dot_dimension_numbers<[1], [0], [0], [1], [0, 0, 1, 1], [], []>} : vector<64x4xbf16>, vector<4x128xbf16>, vector<64x128xf32> -> vector<64x128xf32>
    %7 = vector.broadcast %2 : vector<1x128xf32> to vector<64x128xf32>
    %8 = arith.addf %6, %7 : vector<64x128xf32>
    %c0_8 = arith.constant 0 : index
    %c0_9 = arith.constant 0 : index
    %9 = vector.load %arg12[%c0_8, %c0_9] : memref<64x128xf32, #tpu.memory_space<vmem>>, vector<64x128xf32>
    tpu.vector_store %arg12[%c0_8, %c0_9], %8 {strides = array<i32>} : memref<64x128xf32, #tpu.memory_space<vmem>>, vector<64x128xf32>,
    %c0_10 = arith.constant 0 : index
    %c0_11 = arith.constant 0 : index
    %10 = vector.load %arg12[%c0_10, %c0_11] : memref<64x128xf32, #tpu.memory_space<vmem>>, vector<8x128xf32>
    %11 = vector.extract_strided_slice %10 {offsets = [0, 0], sizes = [8, 96], strides = [1, 1]} : vector<8x128xf32> to vector<8x96xf32>
    %12 = arith.negf %11 : vector<8x96xf32>
    %13 = math.exp %12 : vector<8x96xf32>
    %cst_12 = arith.constant 1.000000e+00 : f32
    %14 = vector.broadcast %cst_12 : f32 to vector<8x96xf32>
    %15 = arith.addf %14, %13 : vector<8x96xf32>
    %16 = arith.divf %14, %15 : vector<8x96xf32>
    %17 = vector.extract_strided_slice %10 {offsets = [0, 96], sizes = [8, 32], strides = [1, 1]} : vector<8x128xf32> to vector<8x32xf32>
    %18 = math.tanh %17 : vector<8x32xf32>
    %19 = vector.extract_strided_slice %16 {offsets = [0, 0], sizes = [8, 32], strides = [1, 1]} : vector<8x96xf32> to vector<8x32xf32>
    %20 = vector.extract_strided_slice %16 {offsets = [0, 64], sizes = [8, 32], strides = [1, 1]} : vector<8x96xf32> to vector<8x32xf32>
    %21 = arith.mulf %19, %18 : vector<8x32xf32>
    %22 = math.tanh %21 : vector<8x32xf32>
    %23 = arith.mulf %20, %22 : vector<8x32xf32>
    %24 = arith.truncf %23 : vector<8x32xf32> to vector<8x32xbf16>
    %c0_13 = arith.constant 0 : index
    %c0_14 = arith.constant 0 : index
    %25 = vector.load %arg13[%c0_13, %c0_14] : memref<64x32xf32, #tpu.memory_space<vmem>>, vector<8x32xf32>
    tpu.vector_store %arg13[%c0_13, %c0_14], %23 {strides = array<i32>} : memref<64x32xf32, #tpu.memory_space<vmem>>, vector<8x32xf32>,
    %c8 = arith.constant 8 : index
    %c0_15 = arith.constant 0 : index
    %26 = vector.load %arg12[%c8, %c0_15] : memref<64x128xf32, #tpu.memory_space<vmem>>, vector<8x128xf32>
    %cst_16 = arith.constant dense<0.000000e+00> : vector<8x128xf32>
    %27 = tpu.matmul %24, %1, %cst_16 {dimension_numbers = #tpu.dot_dimension_numbers<[1], [0], [0], [1], [0, 0, 1, 1], [], []>} : vector<8x32xbf16>, vector<32x128xbf16>, vector<8x128xf32> -> vector<8x128xf32>
    %28 = arith.addf %26, %27 : vector<8x128xf32>
    %29 = vector.extract_strided_slice %28 {offsets = [0, 0], sizes = [8, 96], strides = [1, 1]} : vector<8x128xf32> to vector<8x96xf32>
    %30 = arith.negf %29 : vector<8x96xf32>
    %31 = math.exp %30 : vector<8x96xf32>
    %cst_17 = arith.constant 1.000000e+00 : f32
    %32 = vector.broadcast %cst_17 : f32 to vector<8x96xf32>
    %33 = arith.addf %32, %31 : vector<8x96xf32>
    %34 = arith.divf %32, %33 : vector<8x96xf32>
    %35 = vector.extract_strided_slice %28 {offsets = [0, 96], sizes = [8, 32], strides = [1, 1]} : vector<8x128xf32> to vector<8x32xf32>
    %36 = math.tanh %35 : vector<8x32xf32>
    %37 = vector.extract_strided_slice %34 {offsets = [0, 0], sizes = [8, 32], strides = [1, 1]} : vector<8x96xf32> to vector<8x32xf32>
    %38 = vector.extract_strided_slice %34 {offsets = [0, 32], sizes = [8, 32], strides = [1, 1]} : vector<8x96xf32> to vector<8x32xf32>
    %39 = vector.extract_strided_slice %34 {offsets = [0, 64], sizes = [8, 32], strides = [1, 1]} : vector<8x96xf32> to vector<8x32xf32>
    %40 = arith.mulf %38, %21 : vector<8x32xf32>
    %41 = arith.mulf %37, %36 : vector<8x32xf32>
    %42 = arith.addf %40, %41 : vector<8x32xf32>
    %43 = math.tanh %42 : vector<8x32xf32>
    %44 = arith.mulf %39, %43 : vector<8x32xf32>
    %45 = arith.truncf %44 : vector<8x32xf32> to vector<8x32xbf16>
    %c8_18 = arith.constant 8 : index
    %c0_19 = arith.constant 0 : index
    %46 = vector.load %arg13[%c8_18, %c0_19] : memref<64x32xf32, #tpu.memory_space<vmem>>, vector<8x32xf32>
    tpu.vector_store %arg13[%c8_18, %c0_19], %44 {strides = array<i32>} : memref<64x32xf32, #tpu.memory_space<vmem>>, vector<8x32xf32>,
    %c16 = arith.constant 16 : index
    %c0_20 = arith.constant 0 : index
    %47 = vector.load %arg12[%c16, %c0_20] : memref<64x128xf32, #tpu.memory_space<vmem>>, vector<8x128xf32>
    %cst_21 = arith.constant dense<0.000000e+00> : vector<8x128xf32>
    %48 = tpu.matmul %45, %1, %cst_21 {dimension_numbers = #tpu.dot_dimension_numbers<[1], [0], [0], [1], [0, 0, 1, 1], [], []>} : vector<8x32xbf16>, vector<32x128xbf16>, vector<8x128xf32> -> vector<8x128xf32>
    %49 = arith.addf %47, %48 : vector<8x128xf32>
    %50 = vector.extract_strided_slice %49 {offsets = [0, 0], sizes = [8, 96], strides = [1, 1]} : vector<8x128xf32> to vector<8x96xf32>
    %51 = arith.negf %50 : vector<8x96xf32>
    %52 = math.exp %51 : vector<8x96xf32>
    %cst_22 = arith.constant 1.000000e+00 : f32
    %53 = vector.broadcast %cst_22 : f32 to vector<8x96xf32>
    %54 = arith.addf %53, %52 : vector<8x96xf32>
    %55 = arith.divf %53, %54 : vector<8x96xf32>
    %56 = vector.extract_strided_slice %49 {offsets = [0, 96], sizes = [8, 32], strides = [1, 1]} : vector<8x128xf32> to vector<8x32xf32>
    %57 = math.tanh %56 : vector<8x32xf32>
    %58 = vector.extract_strided_slice %55 {offsets = [0, 0], sizes = [8, 32], strides = [1, 1]} : vector<8x96xf32> to vector<8x32xf32>
    %59 = vector.extract_strided_slice %55 {offsets = [0, 32], sizes = [8, 32], strides = [1, 1]} : vector<8x96xf32> to vector<8x32xf32>
    %60 = vector.extract_strided_slice %55 {offsets = [0, 64], sizes = [8, 32], strides = [1, 1]} : vector<8x96xf32> to vector<8x32xf32>
    %61 = arith.mulf %59, %42 : vector<8x32xf32>
    %62 = arith.mulf %58, %57 : vector<8x32xf32>
    %63 = arith.addf %61, %62 : vector<8x32xf32>
    %64 = math.tanh %63 : vector<8x32xf32>
    %65 = arith.mulf %60, %64 : vector<8x32xf32>
    %66 = arith.truncf %65 : vector<8x32xf32> to vector<8x32xbf16>
    %c16_23 = arith.constant 16 : index
    %c0_24 = arith.constant 0 : index
    %67 = vector.load %arg13[%c16_23, %c0_24] : memref<64x32xf32, #tpu.memory_space<vmem>>, vector<8x32xf32>
    tpu.vector_store %arg13[%c16_23, %c0_24], %65 {strides = array<i32>} : memref<64x32xf32, #tpu.memory_space<vmem>>, vector<8x32xf32>,
    %c24 = arith.constant 24 : index
    %c0_25 = arith.constant 0 : index
    %68 = vector.load %arg12[%c24, %c0_25] : memref<64x128xf32, #tpu.memory_space<vmem>>, vector<8x128xf32>
    %cst_26 = arith.constant dense<0.000000e+00> : vector<8x128xf32>
    %69 = tpu.matmul %66, %1, %cst_26 {dimension_numbers = #tpu.dot_dimension_numbers<[1], [0], [0], [1], [0, 0, 1, 1], [], []>} : vector<8x32xbf16>, vector<32x128xbf16>, vector<8x128xf32> -> vector<8x128xf32>
    %70 = arith.addf %68, %69 : vector<8x128xf32>
    %71 = vector.extract_strided_slice %70 {offsets = [0, 0], sizes = [8, 96], strides = [1, 1]} : vector<8x128xf32> to vector<8x96xf32>
    %72 = arith.negf %71 : vector<8x96xf32>
    %73 = math.exp %72 : vector<8x96xf32>
    %cst_27 = arith.constant 1.000000e+00 : f32
    %74 = vector.broadcast %cst_27 : f32 to vector<8x96xf32>
    %75 = arith.addf %74, %73 : vector<8x96xf32>
    %76 = arith.divf %74, %75 : vector<8x96xf32>
    %77 = vector.extract_strided_slice %70 {offsets = [0, 96], sizes = [8, 32], strides = [1, 1]} : vector<8x128xf32> to vector<8x32xf32>
    %78 = math.tanh %77 : vector<8x32xf32>
    %79 = vector.extract_strided_slice %76 {offsets = [0, 0], sizes = [8, 32], strides = [1, 1]} : vector<8x96xf32> to vector<8x32xf32>
    %80 = vector.extract_strided_slice %76 {offsets = [0, 32], sizes = [8, 32], strides = [1, 1]} : vector<8x96xf32> to vector<8x32xf32>
    %81 = vector.extract_strided_slice %76 {offsets = [0, 64], sizes = [8, 32], strides = [1, 1]} : vector<8x96xf32> to vector<8x32xf32>
    %82 = arith.mulf %80, %63 : vector<8x32xf32>
    %83 = arith.mulf %79, %78 : vector<8x32xf32>
    %84 = arith.addf %82, %83 : vector<8x32xf32>
    %85 = math.tanh %84 : vector<8x32xf32>
    %86 = arith.mulf %81, %85 : vector<8x32xf32>
    %87 = arith.truncf %86 : vector<8x32xf32> to vector<8x32xbf16>
    %c24_28 = arith.constant 24 : index
    %c0_29 = arith.constant 0 : index
    %88 = vector.load %arg13[%c24_28, %c0_29] : memref<64x32xf32, #tpu.memory_space<vmem>>, vector<8x32xf32>
    tpu.vector_store %arg13[%c24_28, %c0_29], %86 {strides = array<i32>} : memref<64x32xf32, #tpu.memory_space<vmem>>, vector<8x32xf32>,
    %c32 = arith.constant 32 : index
    %c0_30 = arith.constant 0 : index
    %89 = vector.load %arg12[%c32, %c0_30] : memref<64x128xf32, #tpu.memory_space<vmem>>, vector<8x128xf32>
    %cst_31 = arith.constant dense<0.000000e+00> : vector<8x128xf32>
    %90 = tpu.matmul %87, %1, %cst_31 {dimension_numbers = #tpu.dot_dimension_numbers<[1], [0], [0], [1], [0, 0, 1, 1], [], []>} : vector<8x32xbf16>, vector<32x128xbf16>, vector<8x128xf32> -> vector<8x128xf32>
    %91 = arith.addf %89, %90 : vector<8x128xf32>
    %92 = vector.extract_strided_slice %91 {offsets = [0, 0], sizes = [8, 96], strides = [1, 1]} : vector<8x128xf32> to vector<8x96xf32>
    %93 = arith.negf %92 : vector<8x96xf32>
    %94 = math.exp %93 : vector<8x96xf32>
    %cst_32 = arith.constant 1.000000e+00 : f32
    %95 = vector.broadcast %cst_32 : f32 to vector<8x96xf32>
    %96 = arith.addf %95, %94 : vector<8x96xf32>
    %97 = arith.divf %95, %96 : vector<8x96xf32>
    %98 = vector.extract_strided_slice %91 {offsets = [0, 96], sizes = [8, 32], strides = [1, 1]} : vector<8x128xf32> to vector<8x32xf32>
    %99 = math.tanh %98 : vector<8x32xf32>
    %100 = vector.extract_strided_slice %97 {offsets = [0, 0], sizes = [8, 32], strides = [1, 1]} : vector<8x96xf32> to vector<8x32xf32>
    %101 = vector.extract_strided_slice %97 {offsets = [0, 32], sizes = [8, 32], strides = [1, 1]} : vector<8x96xf32> to vector<8x32xf32>
    %102 = vector.extract_strided_slice %97 {offsets = [0, 64], sizes = [8, 32], strides = [1, 1]} : vector<8x96xf32> to vector<8x32xf32>
    %103 = arith.mulf %101, %84 : vector<8x32xf32>
    %104 = arith.mulf %100, %99 : vector<8x32xf32>
    %105 = arith.addf %103, %104 : vector<8x32xf32>
    %106 = math.tanh %105 : vector<8x32xf32>
    %107 = arith.mulf %102, %106 : vector<8x32xf32>
    %108 = arith.truncf %107 : vector<8x32xf32> to vector<8x32xbf16>
    %c32_33 = arith.constant 32 : index
    %c0_34 = arith.constant 0 : index
    %109 = vector.load %arg13[%c32_33, %c0_34] : memref<64x32xf32, #tpu.memory_space<vmem>>, vector<8x32xf32>
    tpu.vector_store %arg13[%c32_33, %c0_34], %107 {strides = array<i32>} : memref<64x32xf32, #tpu.memory_space<vmem>>, vector<8x32xf32>,
    %c40 = arith.constant 40 : index
    %c0_35 = arith.constant 0 : index
    %110 = vector.load %arg12[%c40, %c0_35] : memref<64x128xf32, #tpu.memory_space<vmem>>, vector<8x128xf32>
    %cst_36 = arith.constant dense<0.000000e+00> : vector<8x128xf32>
    %111 = tpu.matmul %108, %1, %cst_36 {dimension_numbers = #tpu.dot_dimension_numbers<[1], [0], [0], [1], [0, 0, 1, 1], [], []>} : vector<8x32xbf16>, vector<32x128xbf16>, vector<8x128xf32> -> vector<8x128xf32>
    %112 = arith.addf %110, %111 : vector<8x128xf32>
    %113 = vector.extract_strided_slice %112 {offsets = [0, 0], sizes = [8, 96], strides = [1, 1]} : vector<8x128xf32> to vector<8x96xf32>
    %114 = arith.negf %113 : vector<8x96xf32>
    %115 = math.exp %114 : vector<8x96xf32>
    %cst_37 = arith.constant 1.000000e+00 : f32
    %116 = vector.broadcast %cst_37 : f32 to vector<8x96xf32>
    %117 = arith.addf %116, %115 : vector<8x96xf32>
    %118 = arith.divf %116, %117 : vector<8x96xf32>
    %119 = vector.extract_strided_slice %112 {offsets = [0, 96], sizes = [8, 32], strides = [1, 1]} : vector<8x128xf32> to vector<8x32xf32>
    %120 = math.tanh %119 : vector<8x32xf32>
    %121 = vector.extract_strided_slice %118 {offsets = [0, 0], sizes = [8, 32], strides = [1, 1]} : vector<8x96xf32> to vector<8x32xf32>
    %122 = vector.extract_strided_slice %118 {offsets = [0, 32], sizes = [8, 32], strides = [1, 1]} : vector<8x96xf32> to vector<8x32xf32>
    %123 = vector.extract_strided_slice %118 {offsets = [0, 64], sizes = [8, 32], strides = [1, 1]} : vector<8x96xf32> to vector<8x32xf32>
    %124 = arith.mulf %122, %105 : vector<8x32xf32>
    %125 = arith.mulf %121, %120 : vector<8x32xf32>
    %126 = arith.addf %124, %125 : vector<8x32xf32>
    %127 = math.tanh %126 : vector<8x32xf32>
    %128 = arith.mulf %123, %127 : vector<8x32xf32>
    %129 = arith.truncf %128 : vector<8x32xf32> to vector<8x32xbf16>
    %c40_38 = arith.constant 40 : index
    %c0_39 = arith.constant 0 : index
    %130 = vector.load %arg13[%c40_38, %c0_39] : memref<64x32xf32, #tpu.memory_space<vmem>>, vector<8x32xf32>
    tpu.vector_store %arg13[%c40_38, %c0_39], %128 {strides = array<i32>} : memref<64x32xf32, #tpu.memory_space<vmem>>, vector<8x32xf32>,
    %c48 = arith.constant 48 : index
    %c0_40 = arith.constant 0 : index
    %131 = vector.load %arg12[%c48, %c0_40] : memref<64x128xf32, #tpu.memory_space<vmem>>, vector<8x128xf32>
    %cst_41 = arith.constant dense<0.000000e+00> : vector<8x128xf32>
    %132 = tpu.matmul %129, %1, %cst_41 {dimension_numbers = #tpu.dot_dimension_numbers<[1], [0], [0], [1], [0, 0, 1, 1], [], []>} : vector<8x32xbf16>, vector<32x128xbf16>, vector<8x128xf32> -> vector<8x128xf32>
    %133 = arith.addf %131, %132 : vector<8x128xf32>
    %134 = vector.extract_strided_slice %133 {offsets = [0, 0], sizes = [8, 96], strides = [1, 1]} : vector<8x128xf32> to vector<8x96xf32>
    %135 = arith.negf %134 : vector<8x96xf32>
    %136 = math.exp %135 : vector<8x96xf32>
    %cst_42 = arith.constant 1.000000e+00 : f32
    %137 = vector.broadcast %cst_42 : f32 to vector<8x96xf32>
    %138 = arith.addf %137, %136 : vector<8x96xf32>
    %139 = arith.divf %137, %138 : vector<8x96xf32>
    %140 = vector.extract_strided_slice %133 {offsets = [0, 96], sizes = [8, 32], strides = [1, 1]} : vector<8x128xf32> to vector<8x32xf32>
    %141 = math.tanh %140 : vector<8x32xf32>
    %142 = vector.extract_strided_slice %139 {offsets = [0, 0], sizes = [8, 32], strides = [1, 1]} : vector<8x96xf32> to vector<8x32xf32>
    %143 = vector.extract_strided_slice %139 {offsets = [0, 32], sizes = [8, 32], strides = [1, 1]} : vector<8x96xf32> to vector<8x32xf32>
    %144 = vector.extract_strided_slice %139 {offsets = [0, 64], sizes = [8, 32], strides = [1, 1]} : vector<8x96xf32> to vector<8x32xf32>
    %145 = arith.mulf %143, %126 : vector<8x32xf32>
    %146 = arith.mulf %142, %141 : vector<8x32xf32>
    %147 = arith.addf %145, %146 : vector<8x32xf32>
    %148 = math.tanh %147 : vector<8x32xf32>
    %149 = arith.mulf %144, %148 : vector<8x32xf32>
    %150 = arith.truncf %149 : vector<8x32xf32> to vector<8x32xbf16>
    %c48_43 = arith.constant 48 : index
    %c0_44 = arith.constant 0 : index
    %151 = vector.load %arg13[%c48_43, %c0_44] : memref<64x32xf32, #tpu.memory_space<vmem>>, vector<8x32xf32>
    tpu.vector_store %arg13[%c48_43, %c0_44], %149 {strides = array<i32>} : memref<64x32xf32, #tpu.memory_space<vmem>>, vector<8x32xf32>,
    %c56 = arith.constant 56 : index
    %c0_45 = arith.constant 0 : index
    %152 = vector.load %arg12[%c56, %c0_45] : memref<64x128xf32, #tpu.memory_space<vmem>>, vector<8x128xf32>
    %cst_46 = arith.constant dense<0.000000e+00> : vector<8x128xf32>
    %153 = tpu.matmul %150, %1, %cst_46 {dimension_numbers = #tpu.dot_dimension_numbers<[1], [0], [0], [1], [0, 0, 1, 1], [], []>} : vector<8x32xbf16>, vector<32x128xbf16>, vector<8x128xf32> -> vector<8x128xf32>
    %154 = arith.addf %152, %153 : vector<8x128xf32>
    %155 = vector.extract_strided_slice %154 {offsets = [0, 0], sizes = [8, 96], strides = [1, 1]} : vector<8x128xf32> to vector<8x96xf32>
    %156 = arith.negf %155 : vector<8x96xf32>
    %157 = math.exp %156 : vector<8x96xf32>
    %cst_47 = arith.constant 1.000000e+00 : f32
    %158 = vector.broadcast %cst_47 : f32 to vector<8x96xf32>
    %159 = arith.addf %158, %157 : vector<8x96xf32>
    %160 = arith.divf %158, %159 : vector<8x96xf32>
    %161 = vector.extract_strided_slice %154 {offsets = [0, 96], sizes = [8, 32], strides = [1, 1]} : vector<8x128xf32> to vector<8x32xf32>
    %162 = math.tanh %161 : vector<8x32xf32>
    %163 = vector.extract_strided_slice %160 {offsets = [0, 0], sizes = [8, 32], strides = [1, 1]} : vector<8x96xf32> to vector<8x32xf32>
    %164 = vector.extract_strided_slice %160 {offsets = [0, 32], sizes = [8, 32], strides = [1, 1]} : vector<8x96xf32> to vector<8x32xf32>
    %165 = vector.extract_strided_slice %160 {offsets = [0, 64], sizes = [8, 32], strides = [1, 1]} : vector<8x96xf32> to vector<8x32xf32>
    %166 = arith.mulf %164, %147 : vector<8x32xf32>
    %167 = arith.mulf %163, %162 : vector<8x32xf32>
    %168 = arith.addf %166, %167 : vector<8x32xf32>
    %169 = math.tanh %168 : vector<8x32xf32>
    %170 = arith.mulf %165, %169 : vector<8x32xf32>
    %c56_48 = arith.constant 56 : index
    %c0_49 = arith.constant 0 : index
    %171 = vector.load %arg13[%c56_48, %c0_49] : memref<64x32xf32, #tpu.memory_space<vmem>>, vector<8x32xf32>
    tpu.vector_store %arg13[%c56_48, %c0_49], %170 {strides = array<i32>} : memref<64x32xf32, #tpu.memory_space<vmem>>, vector<8x32xf32>,
    %c0_50 = arith.constant 0 : index
    %c0_51 = arith.constant 0 : index
    %172 = vector.load %arg5[%c0_50, %c0_51] : memref<32x128xbf16, #tpu.memory_space<vmem>>, vector<32x128xbf16>
    %c0_52 = arith.constant 0 : index
    %c0_53 = arith.constant 0 : index
    %173 = vector.load %arg6[%c0_52, %c0_53] : memref<32x128xbf16, #tpu.memory_space<vmem>>, vector<32x128xbf16>
    %c0_54 = arith.constant 0 : index
    %c0_55 = arith.constant 0 : index
    %174 = vector.load %arg7[%c0_54, %c0_55] : memref<1x128xf32, #tpu.memory_space<vmem>>, vector<1x128xf32>
    %c0_56 = arith.constant 0 : index
    %c0_57 = arith.constant 0 : index
    %175 = vector.load %arg13[%c0_56, %c0_57] : memref<64x32xf32, #tpu.memory_space<vmem>>, vector<64x32xf32>
    %176 = arith.truncf %175 : vector<64x32xf32> to vector<64x32xbf16>
    %cst_58 = arith.constant dense<0.000000e+00> : vector<64x128xf32>
    %177 = tpu.matmul %176, %172, %cst_58 {dimension_numbers = #tpu.dot_dimension_numbers<[1], [0], [0], [1], [0, 0, 1, 1], [], []>} : vector<64x32xbf16>, vector<32x128xbf16>, vector<64x128xf32> -> vector<64x128xf32>
    %178 = vector.broadcast %174 : vector<1x128xf32> to vector<64x128xf32>
    %179 = arith.addf %177, %178 : vector<64x128xf32>
    %c0_59 = arith.constant 0 : index
    %c0_60 = arith.constant 0 : index
    %180 = vector.load %arg12[%c0_59, %c0_60] : memref<64x128xf32, #tpu.memory_space<vmem>>, vector<64x128xf32>
    tpu.vector_store %arg12[%c0_59, %c0_60], %179 {strides = array<i32>} : memref<64x128xf32, #tpu.memory_space<vmem>>, vector<64x128xf32>,
    %c0_61 = arith.constant 0 : index
    %c0_62 = arith.constant 0 : index
    %181 = vector.load %arg12[%c0_61, %c0_62] : memref<64x128xf32, #tpu.memory_space<vmem>>, vector<8x128xf32>
    %182 = vector.extract_strided_slice %181 {offsets = [0, 0], sizes = [8, 96], strides = [1, 1]} : vector<8x128xf32> to vector<8x96xf32>
    %183 = arith.negf %182 : vector<8x96xf32>
    %184 = math.exp %183 : vector<8x96xf32>
    %cst_63 = arith.constant 1.000000e+00 : f32
    %185 = vector.broadcast %cst_63 : f32 to vector<8x96xf32>
    %186 = arith.addf %185, %184 : vector<8x96xf32>
    %187 = arith.divf %185, %186 : vector<8x96xf32>
    %188 = vector.extract_strided_slice %181 {offsets = [0, 96], sizes = [8, 32], strides = [1, 1]} : vector<8x128xf32> to vector<8x32xf32>
    %189 = math.tanh %188 : vector<8x32xf32>
    %190 = vector.extract_strided_slice %187 {offsets = [0, 0], sizes = [8, 32], strides = [1, 1]} : vector<8x96xf32> to vector<8x32xf32>
    %191 = vector.extract_strided_slice %187 {offsets = [0, 64], sizes = [8, 32], strides = [1, 1]} : vector<8x96xf32> to vector<8x32xf32>
    %192 = arith.mulf %190, %189 : vector<8x32xf32>
    %193 = math.tanh %192 : vector<8x32xf32>
    %194 = arith.mulf %191, %193 : vector<8x32xf32>
    %195 = arith.truncf %194 : vector<8x32xf32> to vector<8x32xbf16>
    %c8_64 = arith.constant 8 : index
    %c0_65 = arith.constant 0 : index
    %196 = vector.load %arg12[%c8_64, %c0_65] : memref<64x128xf32, #tpu.memory_space<vmem>>, vector<8x128xf32>
    %cst_66 = arith.constant dense<0.000000e+00> : vector<8x128xf32>
    %197 = tpu.matmul %195, %173, %cst_66 {dimension_numbers = #tpu.dot_dimension_numbers<[1], [0], [0], [1], [0, 0, 1, 1], [], []>} : vector<8x32xbf16>, vector<32x128xbf16>, vector<8x128xf32> -> vector<8x128xf32>
    %198 = arith.addf %196, %197 : vector<8x128xf32>
    %199 = vector.extract_strided_slice %198 {offsets = [0, 0], sizes = [8, 96], strides = [1, 1]} : vector<8x128xf32> to vector<8x96xf32>
    %200 = arith.negf %199 : vector<8x96xf32>
    %201 = math.exp %200 : vector<8x96xf32>
    %cst_67 = arith.constant 1.000000e+00 : f32
    %202 = vector.broadcast %cst_67 : f32 to vector<8x96xf32>
    %203 = arith.addf %202, %201 : vector<8x96xf32>
    %204 = arith.divf %202, %203 : vector<8x96xf32>
    %205 = vector.extract_strided_slice %198 {offsets = [0, 96], sizes = [8, 32], strides = [1, 1]} : vector<8x128xf32> to vector<8x32xf32>
    %206 = math.tanh %205 : vector<8x32xf32>
    %207 = vector.extract_strided_slice %204 {offsets = [0, 0], sizes = [8, 32], strides = [1, 1]} : vector<8x96xf32> to vector<8x32xf32>
    %208 = vector.extract_strided_slice %204 {offsets = [0, 32], sizes = [8, 32], strides = [1, 1]} : vector<8x96xf32> to vector<8x32xf32>
    %209 = vector.extract_strided_slice %204 {offsets = [0, 64], sizes = [8, 32], strides = [1, 1]} : vector<8x96xf32> to vector<8x32xf32>
    %210 = arith.mulf %208, %192 : vector<8x32xf32>
    %211 = arith.mulf %207, %206 : vector<8x32xf32>
    %212 = arith.addf %210, %211 : vector<8x32xf32>
    %213 = math.tanh %212 : vector<8x32xf32>
    %214 = arith.mulf %209, %213 : vector<8x32xf32>
    %215 = arith.truncf %214 : vector<8x32xf32> to vector<8x32xbf16>
    %216 = arith.addf %194, %214 : vector<8x32xf32>
    %217 = arith.maximumf %194, %214 : vector<8x32xf32>
    %c16_68 = arith.constant 16 : index
    %c0_69 = arith.constant 0 : index
    %218 = vector.load %arg12[%c16_68, %c0_69] : memref<64x128xf32, #tpu.memory_space<vmem>>, vector<8x128xf32>
    %cst_70 = arith.constant dense<0.000000e+00> : vector<8x128xf32>
    %219 = tpu.matmul %215, %173, %cst_70 {dimension_numbers = #tpu.dot_dimension_numbers<[1], [0], [0], [1], [0, 0, 1, 1], [], []>} : vector<8x32xbf16>, vector<32x128xbf16>, vector<8x128xf32> -> vector<8x128xf32>
    %220 = arith.addf %218, %219 : vector<8x128xf32>
    %221 = vector.extract_strided_slice %220 {offsets = [0, 0], sizes = [8, 96], strides = [1, 1]} : vector<8x128xf32> to vector<8x96xf32>
    %222 = arith.negf %221 : vector<8x96xf32>
    %223 = math.exp %222 : vector<8x96xf32>
    %cst_71 = arith.constant 1.000000e+00 : f32
    %224 = vector.broadcast %cst_71 : f32 to vector<8x96xf32>
    %225 = arith.addf %224, %223 : vector<8x96xf32>
    %226 = arith.divf %224, %225 : vector<8x96xf32>
    %227 = vector.extract_strided_slice %220 {offsets = [0, 96], sizes = [8, 32], strides = [1, 1]} : vector<8x128xf32> to vector<8x32xf32>
    %228 = math.tanh %227 : vector<8x32xf32>
    %229 = vector.extract_strided_slice %226 {offsets = [0, 0], sizes = [8, 32], strides = [1, 1]} : vector<8x96xf32> to vector<8x32xf32>
    %230 = vector.extract_strided_slice %226 {offsets = [0, 32], sizes = [8, 32], strides = [1, 1]} : vector<8x96xf32> to vector<8x32xf32>
    %231 = vector.extract_strided_slice %226 {offsets = [0, 64], sizes = [8, 32], strides = [1, 1]} : vector<8x96xf32> to vector<8x32xf32>
    %232 = arith.mulf %230, %212 : vector<8x32xf32>
    %233 = arith.mulf %229, %228 : vector<8x32xf32>
    %234 = arith.addf %232, %233 : vector<8x32xf32>
    %235 = math.tanh %234 : vector<8x32xf32>
    %236 = arith.mulf %231, %235 : vector<8x32xf32>
    %237 = arith.truncf %236 : vector<8x32xf32> to vector<8x32xbf16>
    %238 = arith.addf %216, %236 : vector<8x32xf32>
    %239 = arith.maximumf %217, %236 : vector<8x32xf32>
    %c24_72 = arith.constant 24 : index
    %c0_73 = arith.constant 0 : index
    %240 = vector.load %arg12[%c24_72, %c0_73] : memref<64x128xf32, #tpu.memory_space<vmem>>, vector<8x128xf32>
    %cst_74 = arith.constant dense<0.000000e+00> : vector<8x128xf32>
    %241 = tpu.matmul %237, %173, %cst_74 {dimension_numbers = #tpu.dot_dimension_numbers<[1], [0], [0], [1], [0, 0, 1, 1], [], []>} : vector<8x32xbf16>, vector<32x128xbf16>, vector<8x128xf32> -> vector<8x128xf32>
    %242 = arith.addf %240, %241 : vector<8x128xf32>
    %243 = vector.extract_strided_slice %242 {offsets = [0, 0], sizes = [8, 96], strides = [1, 1]} : vector<8x128xf32> to vector<8x96xf32>
    %244 = arith.negf %243 : vector<8x96xf32>
    %245 = math.exp %244 : vector<8x96xf32>
    %cst_75 = arith.constant 1.000000e+00 : f32
    %246 = vector.broadcast %cst_75 : f32 to vector<8x96xf32>
    %247 = arith.addf %246, %245 : vector<8x96xf32>
    %248 = arith.divf %246, %247 : vector<8x96xf32>
    %249 = vector.extract_strided_slice %242 {offsets = [0, 96], sizes = [8, 32], strides = [1, 1]} : vector<8x128xf32> to vector<8x32xf32>
    %250 = math.tanh %249 : vector<8x32xf32>
    %251 = vector.extract_strided_slice %248 {offsets = [0, 0], sizes = [8, 32], strides = [1, 1]} : vector<8x96xf32> to vector<8x32xf32>
    %252 = vector.extract_strided_slice %248 {offsets = [0, 32], sizes = [8, 32], strides = [1, 1]} : vector<8x96xf32> to vector<8x32xf32>
    %253 = vector.extract_strided_slice %248 {offsets = [0, 64], sizes = [8, 32], strides = [1, 1]} : vector<8x96xf32> to vector<8x32xf32>
    %254 = arith.mulf %252, %234 : vector<8x32xf32>
    %255 = arith.mulf %251, %250 : vector<8x32xf32>
    %256 = arith.addf %254, %255 : vector<8x32xf32>
    %257 = math.tanh %256 : vector<8x32xf32>
    %258 = arith.mulf %253, %257 : vector<8x32xf32>
    %259 = arith.truncf %258 : vector<8x32xf32> to vector<8x32xbf16>
    %260 = arith.addf %238, %258 : vector<8x32xf32>
    %261 = arith.maximumf %239, %258 : vector<8x32xf32>
    %c32_76 = arith.constant 32 : index
    %c0_77 = arith.constant 0 : index
    %262 = vector.load %arg12[%c32_76, %c0_77] : memref<64x128xf32, #tpu.memory_space<vmem>>, vector<8x128xf32>
    %cst_78 = arith.constant dense<0.000000e+00> : vector<8x128xf32>
    %263 = tpu.matmul %259, %173, %cst_78 {dimension_numbers = #tpu.dot_dimension_numbers<[1], [0], [0], [1], [0, 0, 1, 1], [], []>} : vector<8x32xbf16>, vector<32x128xbf16>, vector<8x128xf32> -> vector<8x128xf32>
    %264 = arith.addf %262, %263 : vector<8x128xf32>
    %265 = vector.extract_strided_slice %264 {offsets = [0, 0], sizes = [8, 96], strides = [1, 1]} : vector<8x128xf32> to vector<8x96xf32>
    %266 = arith.negf %265 : vector<8x96xf32>
    %267 = math.exp %266 : vector<8x96xf32>
    %cst_79 = arith.constant 1.000000e+00 : f32
    %268 = vector.broadcast %cst_79 : f32 to vector<8x96xf32>
    %269 = arith.addf %268, %267 : vector<8x96xf32>
    %270 = arith.divf %268, %269 : vector<8x96xf32>
    %271 = vector.extract_strided_slice %264 {offsets = [0, 96], sizes = [8, 32], strides = [1, 1]} : vector<8x128xf32> to vector<8x32xf32>
    %272 = math.tanh %271 : vector<8x32xf32>
    %273 = vector.extract_strided_slice %270 {offsets = [0, 0], sizes = [8, 32], strides = [1, 1]} : vector<8x96xf32> to vector<8x32xf32>
    %274 = vector.extract_strided_slice %270 {offsets = [0, 32], sizes = [8, 32], strides = [1, 1]} : vector<8x96xf32> to vector<8x32xf32>
    %275 = vector.extract_strided_slice %270 {offsets = [0, 64], sizes = [8, 32], strides = [1, 1]} : vector<8x96xf32> to vector<8x32xf32>
    %276 = arith.mulf %274, %256 : vector<8x32xf32>
    %277 = arith.mulf %273, %272 : vector<8x32xf32>
    %278 = arith.addf %276, %277 : vector<8x32xf32>
    %279 = math.tanh %278 : vector<8x32xf32>
    %280 = arith.mulf %275, %279 : vector<8x32xf32>
    %281 = arith.truncf %280 : vector<8x32xf32> to vector<8x32xbf16>
    %282 = arith.addf %260, %280 : vector<8x32xf32>
    %283 = arith.maximumf %261, %280 : vector<8x32xf32>
    %c40_80 = arith.constant 40 : index
    %c0_81 = arith.constant 0 : index
    %284 = vector.load %arg12[%c40_80, %c0_81] : memref<64x128xf32, #tpu.memory_space<vmem>>, vector<8x128xf32>
    %cst_82 = arith.constant dense<0.000000e+00> : vector<8x128xf32>
    %285 = tpu.matmul %281, %173, %cst_82 {dimension_numbers = #tpu.dot_dimension_numbers<[1], [0], [0], [1], [0, 0, 1, 1], [], []>} : vector<8x32xbf16>, vector<32x128xbf16>, vector<8x128xf32> -> vector<8x128xf32>
    %286 = arith.addf %284, %285 : vector<8x128xf32>
    %287 = vector.extract_strided_slice %286 {offsets = [0, 0], sizes = [8, 96], strides = [1, 1]} : vector<8x128xf32> to vector<8x96xf32>
    %288 = arith.negf %287 : vector<8x96xf32>
    %289 = math.exp %288 : vector<8x96xf32>
    %cst_83 = arith.constant 1.000000e+00 : f32
    %290 = vector.broadcast %cst_83 : f32 to vector<8x96xf32>
    %291 = arith.addf %290, %289 : vector<8x96xf32>
    %292 = arith.divf %290, %291 : vector<8x96xf32>
    %293 = vector.extract_strided_slice %286 {offsets = [0, 96], sizes = [8, 32], strides = [1, 1]} : vector<8x128xf32> to vector<8x32xf32>
    %294 = math.tanh %293 : vector<8x32xf32>
    %295 = vector.extract_strided_slice %292 {offsets = [0, 0], sizes = [8, 32], strides = [1, 1]} : vector<8x96xf32> to vector<8x32xf32>
    %296 = vector.extract_strided_slice %292 {offsets = [0, 32], sizes = [8, 32], strides = [1, 1]} : vector<8x96xf32> to vector<8x32xf32>
    %297 = vector.extract_strided_slice %292 {offsets = [0, 64], sizes = [8, 32], strides = [1, 1]} : vector<8x96xf32> to vector<8x32xf32>
    %298 = arith.mulf %296, %278 : vector<8x32xf32>
    %299 = arith.mulf %295, %294 : vector<8x32xf32>
    %300 = arith.addf %298, %299 : vector<8x32xf32>
    %301 = math.tanh %300 : vector<8x32xf32>
    %302 = arith.mulf %297, %301 : vector<8x32xf32>
    %303 = arith.truncf %302 : vector<8x32xf32> to vector<8x32xbf16>
    %304 = arith.addf %282, %302 : vector<8x32xf32>
    %305 = arith.maximumf %283, %302 : vector<8x32xf32>
    %c48_84 = arith.constant 48 : index
    %c0_85 = arith.constant 0 : index
    %306 = vector.load %arg12[%c48_84, %c0_85] : memref<64x128xf32, #tpu.memory_space<vmem>>, vector<8x128xf32>
    %cst_86 = arith.constant dense<0.000000e+00> : vector<8x128xf32>
    %307 = tpu.matmul %303, %173, %cst_86 {dimension_numbers = #tpu.dot_dimension_numbers<[1], [0], [0], [1], [0, 0, 1, 1], [], []>} : vector<8x32xbf16>, vector<32x128xbf16>, vector<8x128xf32> -> vector<8x128xf32>
    %308 = arith.addf %306, %307 : vector<8x128xf32>
    %309 = vector.extract_strided_slice %308 {offsets = [0, 0], sizes = [8, 96], strides = [1, 1]} : vector<8x128xf32> to vector<8x96xf32>
    %310 = arith.negf %309 : vector<8x96xf32>
    %311 = math.exp %310 : vector<8x96xf32>
    %cst_87 = arith.constant 1.000000e+00 : f32
    %312 = vector.broadcast %cst_87 : f32 to vector<8x96xf32>
    %313 = arith.addf %312, %311 : vector<8x96xf32>
    %314 = arith.divf %312, %313 : vector<8x96xf32>
    %315 = vector.extract_strided_slice %308 {offsets = [0, 96], sizes = [8, 32], strides = [1, 1]} : vector<8x128xf32> to vector<8x32xf32>
    %316 = math.tanh %315 : vector<8x32xf32>
    %317 = vector.extract_strided_slice %314 {offsets = [0, 0], sizes = [8, 32], strides = [1, 1]} : vector<8x96xf32> to vector<8x32xf32>
    %318 = vector.extract_strided_slice %314 {offsets = [0, 32], sizes = [8, 32], strides = [1, 1]} : vector<8x96xf32> to vector<8x32xf32>
    %319 = vector.extract_strided_slice %314 {offsets = [0, 64], sizes = [8, 32], strides = [1, 1]} : vector<8x96xf32> to vector<8x32xf32>
    %320 = arith.mulf %318, %300 : vector<8x32xf32>
    %321 = arith.mulf %317, %316 : vector<8x32xf32>
    %322 = arith.addf %320, %321 : vector<8x32xf32>
    %323 = math.tanh %322 : vector<8x32xf32>
    %324 = arith.mulf %319, %323 : vector<8x32xf32>
    %325 = arith.truncf %324 : vector<8x32xf32> to vector<8x32xbf16>
    %326 = arith.addf %304, %324 : vector<8x32xf32>
    %327 = arith.maximumf %305, %324 : vector<8x32xf32>
    %c56_88 = arith.constant 56 : index
    %c0_89 = arith.constant 0 : index
    %328 = vector.load %arg12[%c56_88, %c0_89] : memref<64x128xf32, #tpu.memory_space<vmem>>, vector<8x128xf32>
    %cst_90 = arith.constant dense<0.000000e+00> : vector<8x128xf32>
    %329 = tpu.matmul %325, %173, %cst_90 {dimension_numbers = #tpu.dot_dimension_numbers<[1], [0], [0], [1], [0, 0, 1, 1], [], []>} : vector<8x32xbf16>, vector<32x128xbf16>, vector<8x128xf32> -> vector<8x128xf32>
    %330 = arith.addf %328, %329 : vector<8x128xf32>
    %331 = vector.extract_strided_slice %330 {offsets = [0, 0], sizes = [8, 96], strides = [1, 1]} : vector<8x128xf32> to vector<8x96xf32>
    %332 = arith.negf %331 : vector<8x96xf32>
    %333 = math.exp %332 : vector<8x96xf32>
    %cst_91 = arith.constant 1.000000e+00 : f32
    %334 = vector.broadcast %cst_91 : f32 to vector<8x96xf32>
    %335 = arith.addf %334, %333 : vector<8x96xf32>
    %336 = arith.divf %334, %335 : vector<8x96xf32>
    %337 = vector.extract_strided_slice %330 {offsets = [0, 96], sizes = [8, 32], strides = [1, 1]} : vector<8x128xf32> to vector<8x32xf32>
    %338 = math.tanh %337 : vector<8x32xf32>
    %339 = vector.extract_strided_slice %336 {offsets = [0, 0], sizes = [8, 32], strides = [1, 1]} : vector<8x96xf32> to vector<8x32xf32>
    %340 = vector.extract_strided_slice %336 {offsets = [0, 32], sizes = [8, 32], strides = [1, 1]} : vector<8x96xf32> to vector<8x32xf32>
    %341 = vector.extract_strided_slice %336 {offsets = [0, 64], sizes = [8, 32], strides = [1, 1]} : vector<8x96xf32> to vector<8x32xf32>
    %342 = arith.mulf %340, %322 : vector<8x32xf32>
    %343 = arith.mulf %339, %338 : vector<8x32xf32>
    %344 = arith.addf %342, %343 : vector<8x32xf32>
    %345 = math.tanh %344 : vector<8x32xf32>
    %346 = arith.mulf %341, %345 : vector<8x32xf32>
    %347 = arith.addf %326, %346 : vector<8x32xf32>
    %348 = arith.maximumf %327, %346 : vector<8x32xf32>
    %c0_92 = arith.constant 0 : index
    %c0_93 = arith.constant 0 : index
    %349 = vector.load %arg8[%c0_92, %c0_93] : memref<32x12xf32, #tpu.memory_space<vmem>>, vector<32x12xf32>
    %cst_94 = arith.constant dense<0.000000e+00> : vector<8x12xf32>
    %350 = tpu.matmul %347, %349, %cst_94 {dimension_numbers = #tpu.dot_dimension_numbers<[1], [0], [0], [1], [0, 0, 1, 1], [], []>} : vector<8x32xf32>, vector<32x12xf32>, vector<8x12xf32> -> vector<8x12xf32>
    %c0_95 = arith.constant 0 : index
    %c0_96 = arith.constant 0 : index
    %351 = vector.load %arg9[%c0_95, %c0_96] : memref<32x12xf32, #tpu.memory_space<vmem>>, vector<32x12xf32>
    %cst_97 = arith.constant dense<0.000000e+00> : vector<8x12xf32>
    %352 = tpu.matmul %348, %351, %cst_97 {dimension_numbers = #tpu.dot_dimension_numbers<[1], [0], [0], [1], [0, 0, 1, 1], [], []>} : vector<8x32xf32>, vector<32x12xf32>, vector<8x12xf32> -> vector<8x12xf32>
    %353 = arith.addf %350, %352 : vector<8x12xf32>
    %c0_98 = arith.constant 0 : index
    %c0_99 = arith.constant 0 : index
    %354 = vector.load %arg10[%c0_98, %c0_99] : memref<1x12xf32, #tpu.memory_space<vmem>>, vector<1x12xf32>
    %355 = vector.broadcast %354 : vector<1x12xf32> to vector<8x12xf32>
    %356 = arith.addf %353, %355 : vector<8x12xf32>
    %c0_100 = arith.constant 0 : index
    %c0_101 = arith.constant 0 : index
    %357 = vector.load %arg11[%c0_100, %c0_101] : memref<8x12xf32, #tpu.memory_space<vmem>>, vector<8x12xf32>
    tpu.vector_store %arg11[%c0_100, %c0_101], %356 {strides = array<i32>} : memref<8x12xf32, #tpu.memory_space<vmem>>, vector<8x12xf32>,
    return
  }
  func.func @transform_0(%arg0: i32) -> (i32, i32, i32) {
    %c0_i32 = arith.constant 0 : i32
    %c0_i32_0 = arith.constant 0 : i32
    %c0_i32_1 = arith.constant 0 : i32
    return %c0_i32, %arg0, %c0_i32_0 : i32, i32, i32
  }
  func.func @transform_1(%arg0: i32) -> (i32, i32) {
    %c0_i32 = arith.constant 0 : i32
    %c0_i32_0 = arith.constant 0 : i32
    %c0_i32_1 = arith.constant 0 : i32
    return %c0_i32, %c0_i32_0 : i32, i32
  }
  func.func @transform_2(%arg0: i32) -> (i32, i32) {
    %c0_i32 = arith.constant 0 : i32
    %c0_i32_0 = arith.constant 0 : i32
    %c0_i32_1 = arith.constant 0 : i32
    return %c0_i32, %c0_i32_0 : i32, i32
  }
  func.func @transform_3(%arg0: i32) -> (i32, i32) {
    %c0_i32 = arith.constant 0 : i32
    %c0_i32_0 = arith.constant 0 : i32
    %c0_i32_1 = arith.constant 0 : i32
    return %c0_i32, %c0_i32_0 : i32, i32
  }
  func.func @transform_4(%arg0: i32) -> (i32, i32) {
    %c0_i32 = arith.constant 0 : i32
    %c0_i32_0 = arith.constant 0 : i32
    %c0_i32_1 = arith.constant 0 : i32
    return %c0_i32, %c0_i32_0 : i32, i32
  }
  func.func @transform_5(%arg0: i32) -> (i32, i32) {
    %c0_i32 = arith.constant 0 : i32
    %c0_i32_0 = arith.constant 0 : i32
    %c0_i32_1 = arith.constant 0 : i32
    return %c0_i32, %c0_i32_0 : i32, i32
  }
  func.func @transform_6(%arg0: i32) -> (i32, i32) {
    %c0_i32 = arith.constant 0 : i32
    %c0_i32_0 = arith.constant 0 : i32
    %c0_i32_1 = arith.constant 0 : i32
    return %c0_i32, %c0_i32_0 : i32, i32
  }
  func.func @transform_7(%arg0: i32) -> (i32, i32) {
    %c0_i32 = arith.constant 0 : i32
    %c0_i32_0 = arith.constant 0 : i32
    %c0_i32_1 = arith.constant 0 : i32
    return %c0_i32, %c0_i32_0 : i32, i32
  }
  func.func @transform_8(%arg0: i32) -> (i32, i32) {
    %c0_i32 = arith.constant 0 : i32
    %c0_i32_0 = arith.constant 0 : i32
    %c0_i32_1 = arith.constant 0 : i32
    return %c0_i32, %c0_i32_0 : i32, i32
  }
  func.func @transform_9(%arg0: i32) -> (i32, i32) {
    %c0_i32 = arith.constant 0 : i32
    %c0_i32_0 = arith.constant 0 : i32
    %c0_i32_1 = arith.constant 0 : i32
    return %c0_i32, %c0_i32_0 : i32, i32
  }
  func.func @transform_10(%arg0: i32) -> (i32, i32) {
    %c0_i32 = arith.constant 0 : i32
    %c0_i32_0 = arith.constant 0 : i32
    return %arg0, %c0_i32 : i32, i32
  }
}

</mosaic_0001>

<llo_original>
// kernel: lstm_baseline_forward.1
$region0: #{lstm_baseline_forward.1}
  #allocation0 [shape = 'u32[]', space=smem, size = 0x4, offset = 0x4, fixed_abs, tag = 'smem constant byte address 0x4 - core index']
  #allocation1 [shape = 'u32[144,128]{1,0:T(1,128)}', space=vmem, size = 0x12000, scoped, tag = 'internal scratch']
  #allocation2 [shape = 'f32[64,128]{1,0:T(8,128)}', space=vmem, size = 0x8000, scoped, tag = 'scratch operand']
  #allocation3 [shape = 'f32[64,32]{1,0:T(8,128)}', space=vmem, size = 0x8000, scoped, tag = 'scratch operand']
  %s0 = inlined_call_operand.vmem [shape: f32[8,8,4], index: 0, kind: input, shape index: {}]
  %s1 = inlined_call_operand.vmem [shape: bf16[4,128], index: 1, kind: input, shape index: {}]
  %s2 = inlined_call_operand.vmem [shape: bf16[32,128], index: 2, kind: input, shape index: {}]
  %s3 = inlined_call_operand.vmem [shape: f32[1,128], index: 3, kind: input, shape index: {}]
  %s4 = inlined_call_operand.vmem [shape: bf16[32,128], index: 4, kind: input, shape index: {}]
  %s5 = inlined_call_operand.vmem [shape: bf16[32,128], index: 5, kind: input, shape index: {}]
  %s6 = inlined_call_operand.vmem [shape: f32[1,128], index: 6, kind: input, shape index: {}]
  %s7 = inlined_call_operand.vmem [shape: f32[32,12], index: 7, kind: input, shape index: {}]
  %s8 = inlined_call_operand.vmem [shape: f32[32,12], index: 8, kind: input, shape index: {}]
  %s9 = inlined_call_operand.vmem [shape: f32[1,12], index: 9, kind: input, shape index: {}]
  %s10 = inlined_call_operand.vmem [shape: f32[8,12], index: 10, kind: output, shape index: {}]
  %s11 = sld [smem:[#allocation0]]
  $region50: #{lstm_baseline_forward.1} parent=0
    _
  %s13 = ssub.s32 1, %s11
  %s14 = scalar_select 0, %s13, %s11
  // Predicated region
  $region2: #{lstm_baseline_forward.1} parent=0 // pred_check
    _
  $region3: #{lstm_baseline_forward.1} parent=0 // pred_check_branch
    %16 = sbr.rel (0) target = $region5
  $region4: #{lstm_baseline_forward.1} parent=0 // pred_region
    _
  $region5: #{lstm_baseline_forward.1} parent=0 // pred_fallthru
    _
  // Predicated region
  $region6: #{lstm_baseline_forward.1} parent=0 // pred_check
    _
  $region7: #{lstm_baseline_forward.1} parent=0 // pred_check_branch
    %18 = sbr.rel (0) target = $region9
  $region8: #{lstm_baseline_forward.1} parent=0 // pred_region
    _
  $region9: #{lstm_baseline_forward.1} parent=0 // pred_fallthru
    _
  // Predicated region
  $region10: #{lstm_baseline_forward.1} parent=0 // pred_check
    _
  $region11: #{lstm_baseline_forward.1} parent=0 // pred_check_branch
    %20 = sbr.rel (0) target = $region13
  $region12: #{lstm_baseline_forward.1} parent=0 // pred_region
    _
  $region13: #{lstm_baseline_forward.1} parent=0 // pred_fallthru
    _
  // Predicated region
  $region14: #{lstm_baseline_forward.1} parent=0 // pred_check
    _
  $region15: #{lstm_baseline_forward.1} parent=0 // pred_check_branch
    %22 = sbr.rel (0) target = $region17
  $region16: #{lstm_baseline_forward.1} parent=0 // pred_region
    _
  $region17: #{lstm_baseline_forward.1} parent=0 // pred_fallthru
    _
  // Predicated region
  $region18: #{lstm_baseline_forward.1} parent=0 // pred_check
    _
  $region19: #{lstm_baseline_forward.1} parent=0 // pred_check_branch
    %24 = sbr.rel (0) target = $region21
  $region20: #{lstm_baseline_forward.1} parent=0 // pred_region
    _
  $region21: #{lstm_baseline_forward.1} parent=0 // pred_fallthru
    _
  // Predicated region
  $region22: #{lstm_baseline_forward.1} parent=0 // pred_check
    _
  $region23: #{lstm_baseline_forward.1} parent=0 // pred_check_branch
    %26 = sbr.rel (0) target = $region25
  $region24: #{lstm_baseline_forward.1} parent=0 // pred_region
    _
  $region25: #{lstm_baseline_forward.1} parent=0 // pred_fallthru
    _
  // Predicated region
  $region26: #{lstm_baseline_forward.1} parent=0 // pred_check
    _
  $region27: #{lstm_baseline_forward.1} parent=0 // pred_check_branch
    %28 = sbr.rel (0) target = $region29
  $region28: #{lstm_baseline_forward.1} parent=0 // pred_region
    _
  $region29: #{lstm_baseline_forward.1} parent=0 // pred_fallthru
    _
  // Predicated region
  $region30: #{lstm_baseline_forward.1} parent=0 // pred_check
    _
  $region31: #{lstm_baseline_forward.1} parent=0 // pred_check_branch
    %30 = sbr.rel (0) target = $region33
  $region32: #{lstm_baseline_forward.1} parent=0 // pred_region
    _
  $region33: #{lstm_baseline_forward.1} parent=0 // pred_fallthru
    _
  // Predicated region
  $region34: #{lstm_baseline_forward.1} parent=0 // pred_check
    _
  $region35: #{lstm_baseline_forward.1} parent=0 // pred_check_branch
    %32 = sbr.rel (0) target = $region37
  $region36: #{lstm_baseline_forward.1} parent=0 // pred_region
    _
  $region37: #{lstm_baseline_forward.1} parent=0 // pred_fallthru
    _
  // Predicated region
  $region38: #{lstm_baseline_forward.1} parent=0 // pred_check
    _
  $region39: #{lstm_baseline_forward.1} parent=0 // pred_check_branch
    %34 = sbr.rel (0) target = $region41
  $region40: #{lstm_baseline_forward.1} parent=0 // pred_region
    _
  $region41: #{lstm_baseline_forward.1} parent=0 // pred_fallthru
    _
  %v36 = vld [vmem:[%s1] sm:$0x3]
  %v37 = vld [vmem:[%s2] sm:$0xf]
  %v38 = vld [vmem:[%s2 + $0x4] sm:$0xf]
  %v39 = vld [vmem:[%s2 + $0x8] sm:$0xf]
  %v40 = vld [vmem:[%s2 + $0xc] sm:$0xf]
  %v41 = vld [vmem:[%s3] sm:$0x1]
  %v42 = vld [vmem:[%s0] sm:$0xff]
  %v43 = vld [vmem:[%s0 + $0x8] sm:$0xff]
  %v44 = vld [vmem:[%s0 + $0x10] sm:$0xff]
  %v45 = vld [vmem:[%s0 + $0x18] sm:$0xff]
  %v46 = vld [vmem:[%s0 + $0x20] sm:$0xff]
  %v47 = vld [vmem:[%s0 + $0x28] sm:$0xff]
  %v48 = vld [vmem:[%s0 + $0x30] sm:$0xff]
  %v49 = vld [vmem:[%s0 + $0x38] sm:$0xff]
  %v50 = vpack.c.bf16 %v43, %v42
  %v51 = vpack.c.bf16 %v45, %v44
  %v52 = vpack.c.bf16 %v47, %v46
  %v53 = vpack.c.bf16 %v49, %v48
  %v55 = vlaneseq
  %v56 = vshrl.u32 %v55, 7
  %v57 = vsub.s32 0, %v56
  %v58 = vrot.slane %v41, %v57
  %vm60 = vcmask 31744
  %v62 = vsel %vm60, %v50, 0
  %v65 = vsel %vm60, %v51, 0
  %v68 = vsel %vm60, %v52, 0
  %v71 = vsel %vm60, %v53, 0
  %vm73 = vcmask 1041408
  %v75 = vsel %vm73, %v36, 0
  %77 = vmatprep.subr.bf16.mxu0 0
  %78 = vmatpush1.bf16.msra.mxu0 %v75
  %79 = vmatprep.subr.bf16.mxu0 0
  %80 = vmatpush1.bf16.msra.mxu0 0
  %81 = vmatprep.subr.bf16.mxu0 0
  %82 = vmatpush1.bf16.msra.mxu0 0
  %83 = vmatprep.subr.bf16.mxu0 0
  %84 = vmatpush1.bf16.msra.mxu0 0
  %85 = vmatprep.subr.bf16.mxu0 0
  %86 = vmatpush1.bf16.msra.mxu0 0
  %87 = vmatprep.subr.bf16.mxu0 0
  %88 = vmatpush1.bf16.msra.mxu0 0
  %89 = vmatprep.subr.bf16.mxu0 0
  %90 = vmatpush1.bf16.msra.mxu0 0
  %91 = vmatprep.subr.bf16.mxu0 0
  %92 = vmatpush1.bf16.msra.mxu0 0
  %93 = vmatprep.subr.bf16.mxu0 0
  %94 = vmatpush1.bf16.msra.mxu0 0
  %95 = vmatprep.subr.bf16.mxu0 0
  %96 = vmatpush1.bf16.msra.mxu0 0
  %97 = vmatprep.subr.bf16.mxu0 0
  %98 = vmatpush1.bf16.msra.mxu0 0
  %99 = vmatprep.subr.bf16.mxu0 0
  %100 = vmatpush1.bf16.msra.mxu0 0
  %101 = vmatprep.subr.bf16.mxu0 0
  %102 = vmatpush1.bf16.msra.mxu0 0
  %103 = vmatprep.subr.bf16.mxu0 0
  %104 = vmatpush1.bf16.msra.mxu0 0
  %105 = vmatprep.subr.bf16.mxu0 0
  %106 = vmatpush1.bf16.msra.mxu0 0
  %107 = vmatprep.subr.bf16.mxu0 0
  %108 = vmatpush1.bf16.msra.mxu0 0
  %109 = vmatprep.mubr.bf16.mxu0 0
  %110 = vmatmul.mubr.bf16.gmra.mrb[0].mxu0 %v62
  %v111 = vpop.f32.mrb[0].mxu0
  %v112 = vadd.f32 %v58, %v111
  %v113 = vpop.f32.mrb[0].mxu0
  %v114 = vpop.f32.mrb[0].mxu0
  %v115 = vadd.f32 %v58, %v114
  %v116 = vpop.f32.mrb[0].mxu0
  %117 = vmatprep.mubr.bf16.mxu0 0
  %118 = vmatmul.mubr.bf16.gmra.mrb[0].mxu0 %v65
  %v119 = vpop.f32.mrb[0].mxu0
  %v120 = vadd.f32 %v58, %v119
  %v121 = vpop.f32.mrb[0].mxu0
  %v122 = vpop.f32.mrb[0].mxu0
  %v123 = vadd.f32 %v58, %v122
  %v124 = vpop.f32.mrb[0].mxu0
  %125 = vmatprep.mubr.bf16.mxu0 0
  %126 = vmatmul.mubr.bf16.gmra.mrb[0].mxu0 %v68
  %v127 = vpop.f32.mrb[0].mxu0
  %v128 = vadd.f32 %v58, %v127
  %v129 = vpop.f32.mrb[0].mxu0
  %v130 = vpop.f32.mrb[0].mxu0
  %v131 = vadd.f32 %v58, %v130
  %v132 = vpop.f32.mrb[0].mxu0
  %133 = vmatprep.mubr.bf16.mxu0 0
  %134 = vmatmul.mubr.bf16.gmra.mrb[0].mxu0 %v71
  %v135 = vpop.f32.mrb[0].mxu0
  %v136 = vadd.f32 %v58, %v135
  %v137 = vpop.f32.mrb[0].mxu0
  %v138 = vpop.f32.mrb[0].mxu0
  %v139 = vadd.f32 %v58, %v138
  %v140 = vpop.f32.mrb[0].mxu0
  %141 = vdwg.mxu0
  %142 = vst [vmem:[#allocation2] sm:$0xff] %v112
  %143 = vst [vmem:[#allocation2 + $0x8] sm:$0xff] %v115
  %144 = vst [vmem:[#allocation2 + $0x10] sm:$0xff] %v120
  %145 = vst [vmem:[#allocation2 + $0x18] sm:$0xff] %v123
  %146 = vst [vmem:[#allocation2 + $0x20] sm:$0xff] %v128
  %147 = vst [vmem:[#allocation2 + $0x28] sm:$0xff] %v131
  %148 = vst [vmem:[#allocation2 + $0x30] sm:$0xff] %v136
  %149 = vst [vmem:[#allocation2 + $0x38] sm:$0xff] %v139
  %v150 = vld [vmem:[#allocation2] sm:$0xff]
  %v151 = vxor.u32 %v150, 2147483648
  %v152 = vmul.f32 %v151, 1.442695
  %v153 = vpow.pop %v152
  %v154 = vadd.f32 %v153, 1.0
  %v155 = vrcp.pop %v154
  %v156 = vmul.f32 1.0, %v155
  %v157 = vtanh.pop %v150
  %159 = vrot.lane.b32.xlu0 %v157, 32
  %v160 = vpop.permute.xlu0 %159
  %v162 = vmul.f32 %v156, %v160
  %v163 = vtanh.pop %v162
  %165 = vrot.lane.b32.xlu0 %v163, 64
  %v166 = vpop.permute.xlu0 %165
  %v168 = vmul.f32 %v156, %v166
  %v169 = vpack.c.bf16 %v168, %v168
  %171 = vrot.lane.b32.xlu0 %v168, 64
  %v172 = vpop.permute.xlu0 %171
  %vm174 = vcmask 261120
  %175 = vst.msk [vmem:[#allocation3] sm:$0xff] %vm174, %v172
  %v176 = vld [vmem:[#allocation2 + $0x8] sm:$0xff]
  %178 = vrot.lane.b32.xlu0 %v169, 64
  %v179 = vpop.permute.xlu0 %178
  %v184 = vunpack.c.l.b16 %v37
  %v185 = vunpack.c.l.b16 %v38
  %v186 = vunpack.c.l.b16 %v39
  %v187 = vunpack.c.l.b16 %v40
  %v188 = vpack.c.b16 %v185, %v184
  %v189 = vpack.c.b16 %v187, %v186
  %v193 = vsel %vm174, %v179, 0
  %195 = vmatprep.subr.bf16.mxu0 0
  %196 = vmatpush1.bf16.msra.mxu0 %v188
  %197 = vmatprep.subr.bf16.mxu0 0
  %198 = vmatpush1.bf16.msra.mxu0 %v189
  %199 = vmatprep.subr.bf16.mxu0 0
  %200 = vmatpush1.bf16.msra.mxu0 0
  %201 = vmatprep.subr.bf16.mxu0 0
  %202 = vmatpush1.bf16.msra.mxu0 0
  %203 = vmatprep.subr.bf16.mxu0 0
  %204 = vmatpush1.bf16.msra.mxu0 0
  %205 = vmatprep.subr.bf16.mxu0 0
  %206 = vmatpush1.bf16.msra.mxu0 0
  %207 = vmatprep.subr.bf16.mxu0 0
  %208 = vmatpush1.bf16.msra.mxu0 0
  %209 = vmatprep.subr.bf16.mxu0 0
  %210 = vmatpush1.bf16.msra.mxu0 0
  %211 = vmatprep.subr.bf16.mxu0 0
  %212 = vmatpush1.bf16.msra.mxu0 0
  %213 = vmatprep.subr.bf16.mxu0 0
  %214 = vmatpush1.bf16.msra.mxu0 0
  %215 = vmatprep.subr.bf16.mxu0 0
  %216 = vmatpush1.bf16.msra.mxu0 0
  %217 = vmatprep.subr.bf16.mxu0 0
  %218 = vmatpush1.bf16.msra.mxu0 0
  %219 = vmatprep.subr.bf16.mxu0 0
  %220 = vmatpush1.bf16.msra.mxu0 0
  %221 = vmatprep.subr.bf16.mxu0 0
  %222 = vmatpush1.bf16.msra.mxu0 0
  %223 = vmatprep.subr.bf16.mxu0 0
  %224 = vmatpush1.bf16.msra.mxu0 0
  %225 = vmatprep.subr.bf16.mxu0 0
  %226 = vmatpush1.bf16.msra.mxu0 0
  %227 = vmatprep.mubr.bf16.mxu0 0
  %228 = vmatmul.mubr.bf16.gmra.mrb[0].mxu0 %v193
  %v229 = vpop.f32.mrb[0].mxu0
  %v230 = vadd.f32 0.0, %v229
  %v231 = vpop.f32.mrb[0].mxu0
  %v232 = vpop.f32.mrb[0].mxu0
  %v233 = vpop.f32.mrb[0].mxu0
  %234 = vdwg.mxu0
  %v235 = vadd.f32 %v176, %v230
  %v236 = vxor.u32 %v235, 2147483648
  %v237 = vmul.f32 %v236, 1.442695
  %v238 = vpow.pop %v237
  %v239 = vadd.f32 %v238, 1.0
  %v240 = vrcp.pop %v239
  %v241 = vmul.f32 1.0, %v240
  %v242 = vtanh.pop %v235
  %244 = vrot.lane.b32.xlu0 %v162, 32
  %v245 = vpop.permute.xlu0 %244
  %v247 = vmul.f32 %v241, %v245
  %249 = vrot.lane.b32.xlu0 %v242, 32
  %v250 = vpop.permute.xlu0 %249
  %v252 = vmul.f32 %v241, %v250
  %254 = vrot.lane.b32.xlu0 %v252, 32
  %v255 = vpop.permute.xlu0 %254
  %v257 = vadd.f32 %v247, %v255
  %v258 = vtanh.pop %v257
  %260 = vrot.lane.b32.xlu0 %v258, 32
  %v261 = vpop.permute.xlu0 %260
  %v263 = vmul.f32 %v241, %v261
  %v264 = vpack.c.bf16 %v263, %v263
  %266 = vrot.lane.b32.xlu0 %v263, 64
  %v267 = vpop.permute.xlu0 %266
  %269 = vst.msk [vmem:[#allocation3 + $0x8] sm:$0xff] %vm174, %v267
  %v270 = vld [vmem:[#allocation2 + $0x10] sm:$0xff]
  %272 = vrot.lane.b32.xlu0 %v264, 64
  %v273 = vpop.permute.xlu0 %272
  %v275 = vsel %vm174, %v273, 0
  %277 = vmatprep.subr.bf16.mxu0 0
  %278 = vmatpush1.bf16.msra.mxu0 %v188
  %279 = vmatprep.subr.bf16.mxu0 0
  %280 = vmatpush1.bf16.msra.mxu0 %v189
  %281 = vmatprep.subr.bf16.mxu0 0
  %282 = vmatpush1.bf16.msra.mxu0 0
  %283 = vmatprep.subr.bf16.mxu0 0
  %284 = vmatpush1.bf16.msra.mxu0 0
  %285 = vmatprep.subr.bf16.mxu0 0
  %286 = vmatpush1.bf16.msra.mxu0 0
  %287 = vmatprep.subr.bf16.mxu0 0
  %288 = vmatpush1.bf16.msra.mxu0 0
  %289 = vmatprep.subr.bf16.mxu0 0
  %290 = vmatpush1.bf16.msra.mxu0 0
  %291 = vmatprep.subr.bf16.mxu0 0
  %292 = vmatpush1.bf16.msra.mxu0 0
  %293 = vmatprep.subr.bf16.mxu0 0
  %294 = vmatpush1.bf16.msra.mxu0 0
  %295 = vmatprep.subr.bf16.mxu0 0
  %296 = vmatpush1.bf16.msra.mxu0 0
  %297 = vmatprep.subr.bf16.mxu0 0
  %298 = vmatpush1.bf16.msra.mxu0 0
  %299 = vmatprep.subr.bf16.mxu0 0
  %300 = vmatpush1.bf16.msra.mxu0 0
  %301 = vmatprep.subr.bf16.mxu0 0
  %302 = vmatpush1.bf16.msra.mxu0 0
  %303 = vmatprep.subr.bf16.mxu0 0
  %304 = vmatpush1.bf16.msra.mxu0 0
  %305 = vmatprep.subr.bf16.mxu0 0
  %306 = vmatpush1.bf16.msra.mxu0 0
  %307 = vmatprep.subr.bf16.mxu0 0
  %308 = vmatpush1.bf16.msra.mxu0 0
  %309 = vmatprep.mubr.bf16.mxu0 0
  %310 = vmatmul.mubr.bf16.gmra.mrb[0].mxu0 %v275
  %v311 = vpop.f32.mrb[0].mxu0
  %v312 = vadd.f32 0.0, %v311
  %v313 = vpop.f32.mrb[0].mxu0
  %v314 = vpop.f32.mrb[0].mxu0
  %v315 = vpop.f32.mrb[0].mxu0
  %316 = vdwg.mxu0
  %v317 = vadd.f32 %v270, %v312
  %v318 = vxor.u32 %v317, 2147483648
  %v319 = vmul.f32 %v318, 1.442695
  %v320 = vpow.pop %v319
  %v321 = vadd.f32 %v320, 1.0
  %v322 = vrcp.pop %v321
  %v323 = vmul.f32 1.0, %v322
  %v324 = vtanh.pop %v317
  %v325 = vmul.f32 %v323, %v257
  %327 = vrot.lane.b32.xlu0 %v324, 32
  %v328 = vpop.permute.xlu0 %327
  %v330 = vmul.f32 %v323, %v328
  %332 = vrot.lane.b32.xlu0 %v330, 32
  %v333 = vpop.permute.xlu0 %332
  %v335 = vadd.f32 %v325, %v333
  %v336 = vtanh.pop %v335
  %338 = vrot.lane.b32.xlu0 %v336, 32
  %v339 = vpop.permute.xlu0 %338
  %v341 = vmul.f32 %v323, %v339
  %v342 = vpack.c.bf16 %v341, %v341
  %344 = vrot.lane.b32.xlu0 %v341, 64
  %v345 = vpop.permute.xlu0 %344
  %347 = vst.msk [vmem:[#allocation3 + $0x10] sm:$0xff] %vm174, %v345
  %v348 = vld [vmem:[#allocation2 + $0x18] sm:$0xff]
  %350 = vrot.lane.b32.xlu0 %v342, 64
  %v351 = vpop.permute.xlu0 %350
  %v353 = vsel %vm174, %v351, 0
  %355 = vmatprep.subr.bf16.mxu0 0
  %356 = vmatpush1.bf16.msra.mxu0 %v188
  %357 = vmatprep.subr.bf16.mxu0 0
  %358 = vmatpush1.bf16.msra.mxu0 %v189
  %359 = vmatprep.subr.bf16.mxu0 0
  %360 = vmatpush1.bf16.msra.mxu0 0
  %361 = vmatprep.subr.bf16.mxu0 0
  %362 = vmatpush1.bf16.msra.mxu0 0
  %363 = vmatprep.subr.bf16.mxu0 0
  %364 = vmatpush1.bf16.msra.mxu0 0
  %365 = vmatprep.subr.bf16.mxu0 0
  %366 = vmatpush1.bf16.msra.mxu0 0
  %367 = vmatprep.subr.bf16.mxu0 0
  %368 = vmatpush1.bf16.msra.mxu0 0
  %369 = vmatprep.subr.bf16.mxu0 0
  %370 = vmatpush1.bf16.msra.mxu0 0
  %371 = vmatprep.subr.bf16.mxu0 0
  %372 = vmatpush1.bf16.msra.mxu0 0
  %373 = vmatprep.subr.bf16.mxu0 0
  %374 = vmatpush1.bf16.msra.mxu0 0
  %375 = vmatprep.subr.bf16.mxu0 0
  %376 = vmatpush1.bf16.msra.mxu0 0
  %377 = vmatprep.subr.bf16.mxu0 0
  %378 = vmatpush1.bf16.msra.mxu0 0
  %379 = vmatprep.subr.bf16.mxu0 0
  %380 = vmatpush1.bf16.msra.mxu0 0
  %381 = vmatprep.subr.bf16.mxu0 0
  %382 = vmatpush1.bf16.msra.mxu0 0
  %383 = vmatprep.subr.bf16.mxu0 0
  %384 = vmatpush1.bf16.msra.mxu0 0
  %385 = vmatprep.subr.bf16.mxu0 0
  %386 = vmatpush1.bf16.msra.mxu0 0
  %387 = vmatprep.mubr.bf16.mxu0 0
  %388 = vmatmul.mubr.bf16.gmra.mrb[0].mxu0 %v353
  %v389 = vpop.f32.mrb[0].mxu0
  %v390 = vadd.f32 0.0, %v389
  %v391 = vpop.f32.mrb[0].mxu0
  %v392 = vpop.f32.mrb[0].mxu0
  %v393 = vpop.f32.mrb[0].mxu0
  %394 = vdwg.mxu0
  %v395 = vadd.f32 %v348, %v390
  %v396 = vxor.u32 %v395, 2147483648
  %v397 = vmul.f32 %v396, 1.442695
  %v398 = vpow.pop %v397
  %v399 = vadd.f32 %v398, 1.0
  %v400 = vrcp.pop %v399
  %v401 = vmul.f32 1.0, %v400
  %v402 = vtanh.pop %v395
  %v403 = vmul.f32 %v401, %v335
  %405 = vrot.lane.b32.xlu0 %v402, 32
  %v406 = vpop.permute.xlu0 %405
  %v408 = vmul.f32 %v401, %v406
  %410 = vrot.lane.b32.xlu0 %v408, 32
  %v411 = vpop.permute.xlu0 %410
  %v413 = vadd.f32 %v403, %v411
  %v414 = vtanh.pop %v413
  %416 = vrot.lane.b32.xlu0 %v414, 32
  %v417 = vpop.permute.xlu0 %416
  %v419 = vmul.f32 %v401, %v417
  %v420 = vpack.c.bf16 %v419, %v419
  %422 = vrot.lane.b32.xlu0 %v419, 64
  %v423 = vpop.permute.xlu0 %422
  %425 = vst.msk [vmem:[#allocation3 + $0x18] sm:$0xff] %vm174, %v423
  %v426 = vld [vmem:[#allocation2 + $0x20] sm:$0xff]
  %428 = vrot.lane.b32.xlu0 %v420, 64
  %v429 = vpop.permute.xlu0 %428
  %v431 = vsel %vm174, %v429, 0
  %433 = vmatprep.subr.bf16.mxu0 0
  %434 = vmatpush1.bf16.msra.mxu0 %v188
  %435 = vmatprep.subr.bf16.mxu0 0
  %436 = vmatpush1.bf16.msra.mxu0 %v189
  %437 = vmatprep.subr.bf16.mxu0 0
  %438 = vmatpush1.bf16.msra.mxu0 0
  %439 = vmatprep.subr.bf16.mxu0 0
  %440 = vmatpush1.bf16.msra.mxu0 0
  %441 = vmatprep.subr.bf16.mxu0 0
  %442 = vmatpush1.bf16.msra.mxu0 0
  %443 = vmatprep.subr.bf16.mxu0 0
  %444 = vmatpush1.bf16.msra.mxu0 0
  %445 = vmatprep.subr.bf16.mxu0 0
  %446 = vmatpush1.bf16.msra.mxu0 0
  %447 = vmatprep.subr.bf16.mxu0 0
  %448 = vmatpush1.bf16.msra.mxu0 0
  %449 = vmatprep.subr.bf16.mxu0 0
  %450 = vmatpush1.bf16.msra.mxu0 0
  %451 = vmatprep.subr.bf16.mxu0 0
  %452 = vmatpush1.bf16.msra.mxu0 0
  %453 = vmatprep.subr.bf16.mxu0 0
  %454 = vmatpush1.bf16.msra.mxu0 0
  %455 = vmatprep.subr.bf16.mxu0 0
  %456 = vmatpush1.bf16.msra.mxu0 0
  %457 = vmatprep.subr.bf16.mxu0 0
  %458 = vmatpush1.bf16.msra.mxu0 0
  %459 = vmatprep.subr.bf16.mxu0 0
  %460 = vmatpush1.bf16.msra.mxu0 0
  %461 = vmatprep.subr.bf16.mxu0 0
  %462 = vmatpush1.bf16.msra.mxu0 0
  %463 = vmatprep.subr.bf16.mxu0 0
  %464 = vmatpush1.bf16.msra.mxu0 0
  %465 = vmatprep.mubr.bf16.mxu0 0
  %466 = vmatmul.mubr.bf16.gmra.mrb[0].mxu0 %v431
  %v467 = vpop.f32.mrb[0].mxu0
  %v468 = vadd.f32 0.0, %v467
  %v469 = vpop.f32.mrb[0].mxu0
  %v470 = vpop.f32.mrb[0].mxu0
  %v471 = vpop.f32.mrb[0].mxu0
  %472 = vdwg.mxu0
  %v473 = vadd.f32 %v426, %v468
  %v474 = vxor.u32 %v473, 2147483648
  %v475 = vmul.f32 %v474, 1.442695
  %v476 = vpow.pop %v475
  %v477 = vadd.f32 %v476, 1.0
  %v478 = vrcp.pop %v477
  %v479 = vmul.f32 1.0, %v478
  %v480 = vtanh.pop %v473
  %v481 = vmul.f32 %v479, %v413
  %483 = vrot.lane.b32.xlu0 %v480, 32
  %v484 = vpop.permute.xlu0 %483
  %v486 = vmul.f32 %v479, %v484
  %488 = vrot.lane.b32.xlu0 %v486, 32
  %v489 = vpop.permute.xlu0 %488
  %v491 = vadd.f32 %v481, %v489
  %v492 = vtanh.pop %v491
  %494 = vrot.lane.b32.xlu0 %v492, 32
  %v495 = vpop.permute.xlu0 %494
  %v497 = vmul.f32 %v479, %v495
  %v498 = vpack.c.bf16 %v497, %v497
  %500 = vrot.lane.b32.xlu0 %v497, 64
  %v501 = vpop.permute.xlu0 %500
  %503 = vst.msk [vmem:[#allocation3 + $0x20] sm:$0xff] %vm174, %v501
  %v504 = vld [vmem:[#allocation2 + $0x28] sm:$0xff]
  %506 = vrot.lane.b32.xlu0 %v498, 64
  %v507 = vpop.permute.xlu0 %506
  %v509 = vsel %vm174, %v507, 0
  %511 = vmatprep.subr.bf16.mxu0 0
  %512 = vmatpush1.bf16.msra.mxu0 %v188
  %513 = vmatprep.subr.bf16.mxu0 0
  %514 = vmatpush1.bf16.msra.mxu0 %v189
  %515 = vmatprep.subr.bf16.mxu0 0
  %516 = vmatpush1.bf16.msra.mxu0 0
  %517 = vmatprep.subr.bf16.mxu0 0
  %518 = vmatpush1.bf16.msra.mxu0 0
  %519 = vmatprep.subr.bf16.mxu0 0
  %520 = vmatpush1.bf16.msra.mxu0 0
  %521 = vmatprep.subr.bf16.mxu0 0
  %522 = vmatpush1.bf16.msra.mxu0 0
  %523 = vmatprep.subr.bf16.mxu0 0
  %524 = vmatpush1.bf16.msra.mxu0 0
  %525 = vmatprep.subr.bf16.mxu0 0
  %526 = vmatpush1.bf16.msra.mxu0 0
  %527 = vmatprep.subr.bf16.mxu0 0
  %528 = vmatpush1.bf16.msra.mxu0 0
  %529 = vmatprep.subr.bf16.mxu0 0
  %530 = vmatpush1.bf16.msra.mxu0 0
  %531 = vmatprep.subr.bf16.mxu0 0
  %532 = vmatpush1.bf16.msra.mxu0 0
  %533 = vmatprep.subr.bf16.mxu0 0
  %534 = vmatpush1.bf16.msra.mxu0 0
  %535 = vmatprep.subr.bf16.mxu0 0
  %536 = vmatpush1.bf16.msra.mxu0 0
  %537 = vmatprep.subr.bf16.mxu0 0
  %538 = vmatpush1.bf16.msra.mxu0 0
  %539 = vmatprep.subr.bf16.mxu0 0
  %540 = vmatpush1.bf16.msra.mxu0 0
  %541 = vmatprep.subr.bf16.mxu0 0
  %542 = vmatpush1.bf16.msra.mxu0 0
  %543 = vmatprep.mubr.bf16.mxu0 0
  %544 = vmatmul.mubr.bf16.gmra.mrb[0].mxu0 %v509
  %v545 = vpop.f32.mrb[0].mxu0
  %v546 = vadd.f32 0.0, %v545
  %v547 = vpop.f32.mrb[0].mxu0
  %v548 = vpop.f32.mrb[0].mxu0
  %v549 = vpop.f32.mrb[0].mxu0
  %550 = vdwg.mxu0
  %v551 = vadd.f32 %v504, %v546
  %v552 = vxor.u32 %v551, 2147483648
  %v553 = vmul.f32 %v552, 1.442695
  %v554 = vpow.pop %v553
  %v555 = vadd.f32 %v554, 1.0
  %v556 = vrcp.pop %v555
  %v557 = vmul.f32 1.0, %v556
  %v558 = vtanh.pop %v551
  %v559 = vmul.f32 %v557, %v491
  %561 = vrot.lane.b32.xlu0 %v558, 32
  %v562 = vpop.permute.xlu0 %561
  %v564 = vmul.f32 %v557, %v562
  %566 = vrot.lane.b32.xlu0 %v564, 32
  %v567 = vpop.permute.xlu0 %566
  %v569 = vadd.f32 %v559, %v567
  %v570 = vtanh.pop %v569
  %572 = vrot.lane.b32.xlu0 %v570, 32
  %v573 = vpop.permute.xlu0 %572
  %v575 = vmul.f32 %v557, %v573
  %v576 = vpack.c.bf16 %v575, %v575
  %578 = vrot.lane.b32.xlu0 %v575, 64
  %v579 = vpop.permute.xlu0 %578
  %581 = vst.msk [vmem:[#allocation3 + $0x28] sm:$0xff] %vm174, %v579
  %v582 = vld [vmem:[#allocation2 + $0x30] sm:$0xff]
  %584 = vrot.lane.b32.xlu0 %v576, 64
  %v585 = vpop.permute.xlu0 %584
  %v587 = vsel %vm174, %v585, 0
  %589 = vmatprep.subr.bf16.mxu0 0
  %590 = vmatpush1.bf16.msra.mxu0 %v188
  %591 = vmatprep.subr.bf16.mxu0 0
  %592 = vmatpush1.bf16.msra.mxu0 %v189
  %593 = vmatprep.subr.bf16.mxu0 0
  %594 = vmatpush1.bf16.msra.mxu0 0
  %595 = vmatprep.subr.bf16.mxu0 0
  %596 = vmatpush1.bf16.msra.mxu0 0
  %597 = vmatprep.subr.bf16.mxu0 0
  %598 = vmatpush1.bf16.msra.mxu0 0
  %599 = vmatprep.subr.bf16.mxu0 0
  %600 = vmatpush1.bf16.msra.mxu0 0
  %601 = vmatprep.subr.bf16.mxu0 0
  %602 = vmatpush1.bf16.msra.mxu0 0
  %603 = vmatprep.subr.bf16.mxu0 0
  %604 = vmatpush1.bf16.msra.mxu0 0
  %605 = vmatprep.subr.bf16.mxu0 0
  %606 = vmatpush1.bf16.msra.mxu0 0
  %607 = vmatprep.subr.bf16.mxu0 0
  %608 = vmatpush1.bf16.msra.mxu0 0
  %609 = vmatprep.subr.bf16.mxu0 0
  %610 = vmatpush1.bf16.msra.mxu0 0
  %611 = vmatprep.subr.bf16.mxu0 0
  %612 = vmatpush1.bf16.msra.mxu0 0
  %613 = vmatprep.subr.bf16.mxu0 0
  %614 = vmatpush1.bf16.msra.mxu0 0
  %615 = vmatprep.subr.bf16.mxu0 0
  %616 = vmatpush1.bf16.msra.mxu0 0
  %617 = vmatprep.subr.bf16.mxu0 0
  %618 = vmatpush1.bf16.msra.mxu0 0
  %619 = vmatprep.subr.bf16.mxu0 0
  %620 = vmatpush1.bf16.msra.mxu0 0
  %621 = vmatprep.mubr.bf16.mxu0 0
  %622 = vmatmul.mubr.bf16.gmra.mrb[0].mxu0 %v587
  %v623 = vpop.f32.mrb[0].mxu0
  %v624 = vadd.f32 0.0, %v623
  %v625 = vpop.f32.mrb[0].mxu0
  %v626 = vpop.f32.mrb[0].mxu0
  %v627 = vpop.f32.mrb[0].mxu0
  %628 = vdwg.mxu0
  %v629 = vadd.f32 %v582, %v624
  %v630 = vxor.u32 %v629, 2147483648
  %v631 = vmul.f32 %v630, 1.442695
  %v632 = vpow.pop %v631
  %v633 = vadd.f32 %v632, 1.0
  %v634 = vrcp.pop %v633
  %v635 = vmul.f32 1.0, %v634
  %v636 = vtanh.pop %v629
  %v637 = vmul.f32 %v635, %v569
  %639 = vrot.lane.b32.xlu0 %v636, 32
  %v640 = vpop.permute.xlu0 %639
  %v642 = vmul.f32 %v635, %v640
  %644 = vrot.lane.b32.xlu0 %v642, 32
  %v645 = vpop.permute.xlu0 %644
  %v647 = vadd.f32 %v637, %v645
  %v648 = vtanh.pop %v647
  %650 = vrot.lane.b32.xlu0 %v648, 32
  %v651 = vpop.permute.xlu0 %650
  %v653 = vmul.f32 %v635, %v651
  %v654 = vpack.c.bf16 %v653, %v653
  %656 = vrot.lane.b32.xlu0 %v653, 64
  %v657 = vpop.permute.xlu0 %656
  %659 = vst.msk [vmem:[#allocation3 + $0x30] sm:$0xff] %vm174, %v657
  %v660 = vld [vmem:[#allocation2 + $0x38] sm:$0xff]
  %662 = vrot.lane.b32.xlu0 %v654, 64
  %v663 = vpop.permute.xlu0 %662
  %v665 = vsel %vm174, %v663, 0
  %667 = vmatprep.subr.bf16.mxu0 0
  %668 = vmatpush1.bf16.msra.mxu0 %v188
  %669 = vmatprep.subr.bf16.mxu0 0
  %670 = vmatpush1.bf16.msra.mxu0 %v189
  %671 = vmatprep.subr.bf16.mxu0 0
  %672 = vmatpush1.bf16.msra.mxu0 0
  %673 = vmatprep.subr.bf16.mxu0 0
  %674 = vmatpush1.bf16.msra.mxu0 0
  %675 = vmatprep.subr.bf16.mxu0 0
  %676 = vmatpush1.bf16.msra.mxu0 0
  %677 = vmatprep.subr.bf16.mxu0 0
  %678 = vmatpush1.bf16.msra.mxu0 0
  %679 = vmatprep.subr.bf16.mxu0 0
  %680 = vmatpush1.bf16.msra.mxu0 0
  %681 = vmatprep.subr.bf16.mxu0 0
  %682 = vmatpush1.bf16.msra.mxu0 0
  %683 = vmatprep.subr.bf16.mxu0 0
  %684 = vmatpush1.bf16.msra.mxu0 0
  %685 = vmatprep.subr.bf16.mxu0 0
  %686 = vmatpush1.bf16.msra.mxu0 0
  %687 = vmatprep.subr.bf16.mxu0 0
  %688 = vmatpush1.bf16.msra.mxu0 0
  %689 = vmatprep.subr.bf16.mxu0 0
  %690 = vmatpush1.bf16.msra.mxu0 0
  %691 = vmatprep.subr.bf16.mxu0 0
  %692 = vmatpush1.bf16.msra.mxu0 0
  %693 = vmatprep.subr.bf16.mxu0 0
  %694 = vmatpush1.bf16.msra.mxu0 0
  %695 = vmatprep.subr.bf16.mxu0 0
  %696 = vmatpush1.bf16.msra.mxu0 0
  %697 = vmatprep.subr.bf16.mxu0 0
  %698 = vmatpush1.bf16.msra.mxu0 0
  %699 = vmatprep.mubr.bf16.mxu0 0
  %700 = vmatmul.mubr.bf16.gmra.mrb[0].mxu0 %v665
  %v701 = vpop.f32.mrb[0].mxu0
  %v702 = vadd.f32 0.0, %v701
  %v703 = vpop.f32.mrb[0].mxu0
  %v704 = vpop.f32.mrb[0].mxu0
  %v705 = vpop.f32.mrb[0].mxu0
  %706 = vdwg.mxu0
  %v707 = vadd.f32 %v660, %v702
  %v708 = vxor.u32 %v707, 2147483648
  %v709 = vmul.f32 %v708, 1.442695
  %v710 = vpow.pop %v709
  %v711 = vadd.f32 %v710, 1.0
  %v712 = vrcp.pop %v711
  %v713 = vmul.f32 1.0, %v712
  %v714 = vtanh.pop %v707
  %v715 = vmul.f32 %v713, %v647
  %717 = vrot.lane.b32.xlu0 %v714, 32
  %v718 = vpop.permute.xlu0 %717
  %v720 = vmul.f32 %v713, %v718
  %722 = vrot.lane.b32.xlu0 %v720, 32
  %v723 = vpop.permute.xlu0 %722
  %v725 = vadd.f32 %v715, %v723
  %v726 = vtanh.pop %v725
  %728 = vrot.lane.b32.xlu0 %v726, 32
  %v729 = vpop.permute.xlu0 %728
  %v731 = vmul.f32 %v713, %v729
  %733 = vrot.lane.b32.xlu0 %v731, 64
  %v734 = vpop.permute.xlu0 %733
  %736 = vst.msk [vmem:[#allocation3 + $0x38] sm:$0xff] %vm174, %v734
  %v737 = vld [vmem:[%s4] sm:$0xf]
  %v738 = vld [vmem:[%s4 + $0x4] sm:$0xf]
  %v739 = vld [vmem:[%s4 + $0x8] sm:$0xf]
  %v740 = vld [vmem:[%s4 + $0xc] sm:$0xf]
  %v741 = vld [vmem:[%s5] sm:$0xf]
  %v742 = vld [vmem:[%s5 + $0x4] sm:$0xf]
  %v743 = vld [vmem:[%s5 + $0x8] sm:$0xf]
  %v744 = vld [vmem:[%s5 + $0xc] sm:$0xf]
  %v745 = vld [vmem:[%s6] sm:$0x1]
  %v746 = vld [vmem:[#allocation3] sm:$0xff]
  %v747 = vld [vmem:[#allocation3 + $0x8] sm:$0xff]
  %v748 = vld [vmem:[#allocation3 + $0x10] sm:$0xff]
  %v749 = vld [vmem:[#allocation3 + $0x18] sm:$0xff]
  %v750 = vld [vmem:[#allocation3 + $0x20] sm:$0xff]
  %v751 = vld [vmem:[#allocation3 + $0x28] sm:$0xff]
  %v752 = vld [vmem:[#allocation3 + $0x30] sm:$0xff]
  %v753 = vld [vmem:[#allocation3 + $0x38] sm:$0xff]
  %v754 = vpack.c.bf16 %v747, %v746
  %v755 = vpack.c.bf16 %v749, %v748
  %v756 = vpack.c.bf16 %v751, %v750
  %v757 = vpack.c.bf16 %v753, %v752
  %v759 = vlaneseq
  %v760 = vshrl.u32 %v759, 7
  %v761 = vsub.s32 0, %v760
  %v762 = vrot.slane %v745, %v761
  %v768 = vunpack.c.l.b16 %v737
  %v769 = vunpack.c.l.b16 %v738
  %v770 = vunpack.c.l.b16 %v739
  %v771 = vunpack.c.l.b16 %v740
  %v772 = vpack.c.b16 %v769, %v768
  %v773 = vpack.c.b16 %v771, %v770
  %v777 = vsel %vm174, %v754, 0
  %v780 = vsel %vm174, %v755, 0
  %v783 = vsel %vm174, %v756, 0
  %v786 = vsel %vm174, %v757, 0
  %788 = vmatprep.subr.bf16.mxu0 0
  %789 = vmatpush1.bf16.msra.mxu0 %v772
  %790 = vmatprep.subr.bf16.mxu0 0
  %791 = vmatpush1.bf16.msra.mxu0 %v773
  %792 = vmatprep.subr.bf16.mxu0 0
  %793 = vmatpush1.bf16.msra.mxu0 0
  %794 = vmatprep.subr.bf16.mxu0 0
  %795 = vmatpush1.bf16.msra.mxu0 0
  %796 = vmatprep.subr.bf16.mxu0 0
  %797 = vmatpush1.bf16.msra.mxu0 0
  %798 = vmatprep.subr.bf16.mxu0 0
  %799 = vmatpush1.bf16.msra.mxu0 0
  %800 = vmatprep.subr.bf16.mxu0 0
  %801 = vmatpush1.bf16.msra.mxu0 0
  %802 = vmatprep.subr.bf16.mxu0 0
  %803 = vmatpush1.bf16.msra.mxu0 0
  %804 = vmatprep.subr.bf16.mxu0 0
  %805 = vmatpush1.bf16.msra.mxu0 0
  %806 = vmatprep.subr.bf16.mxu0 0
  %807 = vmatpush1.bf16.msra.mxu0 0
  %808 = vmatprep.subr.bf16.mxu0 0
  %809 = vmatpush1.bf16.msra.mxu0 0
  %810 = vmatprep.subr.bf16.mxu0 0
  %811 = vmatpush1.bf16.msra.mxu0 0
  %812 = vmatprep.subr.bf16.mxu0 0
  %813 = vmatpush1.bf16.msra.mxu0 0
  %814 = vmatprep.subr.bf16.mxu0 0
  %815 = vmatpush1.bf16.msra.mxu0 0
  %816 = vmatprep.subr.bf16.mxu0 0
  %817 = vmatpush1.bf16.msra.mxu0 0
  %818 = vmatprep.subr.bf16.mxu0 0
  %819 = vmatpush1.bf16.msra.mxu0 0
  %820 = vmatprep.mubr.bf16.mxu0 0
  %821 = vmatmul.mubr.bf16.gmra.mrb[0].mxu0 %v777
  %v822 = vpop.f32.mrb[0].mxu0
  %v823 = vadd.f32 %v762, %v822
  %v824 = vpop.f32.mrb[0].mxu0
  %v825 = vpop.f32.mrb[0].mxu0
  %v826 = vadd.f32 %v762, %v825
  %v827 = vpop.f32.mrb[0].mxu0
  %828 = vmatprep.mubr.bf16.mxu0 0
  %829 = vmatmul.mubr.bf16.gmra.mrb[0].mxu0 %v780
  %v830 = vpop.f32.mrb[0].mxu0
  %v831 = vadd.f32 %v762, %v830
  %v832 = vpop.f32.mrb[0].mxu0
  %v833 = vpop.f32.mrb[0].mxu0
  %v834 = vadd.f32 %v762, %v833
  %v835 = vpop.f32.mrb[0].mxu0
  %836 = vmatprep.mubr.bf16.mxu0 0
  %837 = vmatmul.mubr.bf16.gmra.mrb[0].mxu0 %v783
  %v838 = vpop.f32.mrb[0].mxu0
  %v839 = vadd.f32 %v762, %v838
  %v840 = vpop.f32.mrb[0].mxu0
  %v841 = vpop.f32.mrb[0].mxu0
  %v842 = vadd.f32 %v762, %v841
  %v843 = vpop.f32.mrb[0].mxu0
  %844 = vmatprep.mubr.bf16.mxu0 0
  %845 = vmatmul.mubr.bf16.gmra.mrb[0].mxu0 %v786
  %v846 = vpop.f32.mrb[0].mxu0
  %v847 = vadd.f32 %v762, %v846
  %v848 = vpop.f32.mrb[0].mxu0
  %v849 = vpop.f32.mrb[0].mxu0
  %v850 = vadd.f32 %v762, %v849
  %v851 = vpop.f32.mrb[0].mxu0
  %852 = vdwg.mxu0
  %853 = vst [vmem:[#allocation2] sm:$0xff] %v823
  %854 = vst [vmem:[#allocation2 + $0x8] sm:$0xff] %v826
  %855 = vst [vmem:[#allocation2 + $0x10] sm:$0xff] %v831
  %856 = vst [vmem:[#allocation2 + $0x18] sm:$0xff] %v834
  %857 = vst [vmem:[#allocation2 + $0x20] sm:$0xff] %v839
  %858 = vst [vmem:[#allocation2 + $0x28] sm:$0xff] %v842
  %859 = vst [vmem:[#allocation2 + $0x30] sm:$0xff] %v847
  %860 = vst [vmem:[#allocation2 + $0x38] sm:$0xff] %v850
  %v861 = vld [vmem:[#allocation2] sm:$0xff]
  %v862 = vxor.u32 %v861, 2147483648
  %v863 = vmul.f32 %v862, 1.442695
  %v864 = vpow.pop %v863
  %v865 = vadd.f32 %v864, 1.0
  %v866 = vrcp.pop %v865
  %v867 = vmul.f32 1.0, %v866
  %v868 = vtanh.pop %v861
  %870 = vrot.lane.b32.xlu0 %v868, 32
  %v871 = vpop.permute.xlu0 %870
  %v873 = vmul.f32 %v867, %v871
  %v874 = vtanh.pop %v873
  %876 = vrot.lane.b32.xlu0 %v874, 64
  %v877 = vpop.permute.xlu0 %876
  %v879 = vmul.f32 %v867, %v877
  %v880 = vpack.c.bf16 %v879, %v879
  %v881 = vld [vmem:[#allocation2 + $0x8] sm:$0xff]
  %883 = vrot.lane.b32.xlu0 %v880, 64
  %v884 = vpop.permute.xlu0 %883
  %v889 = vunpack.c.l.b16 %v741
  %v890 = vunpack.c.l.b16 %v742
  %v891 = vunpack.c.l.b16 %v743
  %v892 = vunpack.c.l.b16 %v744
  %v893 = vpack.c.b16 %v890, %v889
  %v894 = vpack.c.b16 %v892, %v891
  %v898 = vsel %vm174, %v884, 0
  %900 = vmatprep.subr.bf16.mxu0 0
  %901 = vmatpush1.bf16.msra.mxu0 %v893
  %902 = vmatprep.subr.bf16.mxu0 0
  %903 = vmatpush1.bf16.msra.mxu0 %v894
  %904 = vmatprep.subr.bf16.mxu0 0
  %905 = vmatpush1.bf16.msra.mxu0 0
  %906 = vmatprep.subr.bf16.mxu0 0
  %907 = vmatpush1.bf16.msra.mxu0 0
  %908 = vmatprep.subr.bf16.mxu0 0
  %909 = vmatpush1.bf16.msra.mxu0 0
  %910 = vmatprep.subr.bf16.mxu0 0
  %911 = vmatpush1.bf16.msra.mxu0 0
  %912 = vmatprep.subr.bf16.mxu0 0
  %913 = vmatpush1.bf16.msra.mxu0 0
  %914 = vmatprep.subr.bf16.mxu0 0
  %915 = vmatpush1.bf16.msra.mxu0 0
  %916 = vmatprep.subr.bf16.mxu0 0
  %917 = vmatpush1.bf16.msra.mxu0 0
  %918 = vmatprep.subr.bf16.mxu0 0
  %919 = vmatpush1.bf16.msra.mxu0 0
  %920 = vmatprep.subr.bf16.mxu0 0
  %921 = vmatpush1.bf16.msra.mxu0 0
  %922 = vmatprep.subr.bf16.mxu0 0
  %923 = vmatpush1.bf16.msra.mxu0 0
  %924 = vmatprep.subr.bf16.mxu0 0
  %925 = vmatpush1.bf16.msra.mxu0 0
  %926 = vmatprep.subr.bf16.mxu0 0
  %927 = vmatpush1.bf16.msra.mxu0 0
  %928 = vmatprep.subr.bf16.mxu0 0
  %929 = vmatpush1.bf16.msra.mxu0 0
  %930 = vmatprep.subr.bf16.mxu0 0
  %931 = vmatpush1.bf16.msra.mxu0 0
  %932 = vmatprep.mubr.bf16.mxu0 0
  %933 = vmatmul.mubr.bf16.gmra.mrb[0].mxu0 %v898
  %v934 = vpop.f32.mrb[0].mxu0
  %v935 = vadd.f32 0.0, %v934
  %v936 = vpop.f32.mrb[0].mxu0
  %v937 = vpop.f32.mrb[0].mxu0
  %v938 = vpop.f32.mrb[0].mxu0
  %939 = vdwg.mxu0
  %v940 = vadd.f32 %v881, %v935
  %v941 = vxor.u32 %v940, 2147483648
  %v942 = vmul.f32 %v941, 1.442695
  %v943 = vpow.pop %v942
  %v944 = vadd.f32 %v943, 1.0
  %v945 = vrcp.pop %v944
  %v946 = vmul.f32 1.0, %v945
  %v947 = vtanh.pop %v940
  %949 = vrot.lane.b32.xlu0 %v873, 32
  %v950 = vpop.permute.xlu0 %949
  %v952 = vmul.f32 %v946, %v950
  %954 = vrot.lane.b32.xlu0 %v947, 32
  %v955 = vpop.permute.xlu0 %954
  %v957 = vmul.f32 %v946, %v955
  %959 = vrot.lane.b32.xlu0 %v957, 32
  %v960 = vpop.permute.xlu0 %959
  %v962 = vadd.f32 %v952, %v960
  %v963 = vtanh.pop %v962
  %965 = vrot.lane.b32.xlu0 %v963, 32
  %v966 = vpop.permute.xlu0 %965
  %v968 = vmul.f32 %v946, %v966
  %v969 = vpack.c.bf16 %v968, %v968
  %v970 = vadd.f32 %v879, %v968
  %v971 = vmax.f32 %v879, %v968
  %v972 = vld [vmem:[#allocation2 + $0x10] sm:$0xff]
  %974 = vrot.lane.b32.xlu0 %v969, 64
  %v975 = vpop.permute.xlu0 %974
  %v977 = vsel %vm174, %v975, 0
  %979 = vmatprep.subr.bf16.mxu0 0
  %980 = vmatpush1.bf16.msra.mxu0 %v893
  %981 = vmatprep.subr.bf16.mxu0 0
  %982 = vmatpush1.bf16.msra.mxu0 %v894
  %983 = vmatprep.subr.bf16.mxu0 0
  %984 = vmatpush1.bf16.msra.mxu0 0
  %985 = vmatprep.subr.bf16.mxu0 0
  %986 = vmatpush1.bf16.msra.mxu0 0
  %987 = vmatprep.subr.bf16.mxu0 0
  %988 = vmatpush1.bf16.msra.mxu0 0
  %989 = vmatprep.subr.bf16.mxu0 0
  %990 = vmatpush1.bf16.msra.mxu0 0
  %991 = vmatprep.subr.bf16.mxu0 0
  %992 = vmatpush1.bf16.msra.mxu0 0
  %993 = vmatprep.subr.bf16.mxu0 0
  %994 = vmatpush1.bf16.msra.mxu0 0
  %995 = vmatprep.subr.bf16.mxu0 0
  %996 = vmatpush1.bf16.msra.mxu0 0
  %997 = vmatprep.subr.bf16.mxu0 0
  %998 = vmatpush1.bf16.msra.mxu0 0
  %999 = vmatprep.subr.bf16.mxu0 0
  %1000 = vmatpush1.bf16.msra.mxu0 0
  %1001 = vmatprep.subr.bf16.mxu0 0
  %1002 = vmatpush1.bf16.msra.mxu0 0
  %1003 = vmatprep.subr.bf16.mxu0 0
  %1004 = vmatpush1.bf16.msra.mxu0 0
  %1005 = vmatprep.subr.bf16.mxu0 0
  %1006 = vmatpush1.bf16.msra.mxu0 0
  %1007 = vmatprep.subr.bf16.mxu0 0
  %1008 = vmatpush1.bf16.msra.mxu0 0
  %1009 = vmatprep.subr.bf16.mxu0 0
  %1010 = vmatpush1.bf16.msra.mxu0 0
  %1011 = vmatprep.mubr.bf16.mxu0 0
  %1012 = vmatmul.mubr.bf16.gmra.mrb[0].mxu0 %v977
  %v1013 = vpop.f32.mrb[0].mxu0
  %v1014 = vadd.f32 0.0, %v1013
  %v1015 = vpop.f32.mrb[0].mxu0
  %v1016 = vpop.f32.mrb[0].mxu0
  %v1017 = vpop.f32.mrb[0].mxu0
  %1018 = vdwg.mxu0
  %v1019 = vadd.f32 %v972, %v1014
  %v1020 = vxor.u32 %v1019, 2147483648
  %v1021 = vmul.f32 %v1020, 1.442695
  %v1022 = vpow.pop %v1021
  %v1023 = vadd.f32 %v1022, 1.0
  %v1024 = vrcp.pop %v1023
  %v1025 = vmul.f32 1.0, %v1024
  %v1026 = vtanh.pop %v1019
  %v1027 = vmul.f32 %v1025, %v962
  %1029 = vrot.lane.b32.xlu0 %v1026, 32
  %v1030 = vpop.permute.xlu0 %1029
  %v1032 = vmul.f32 %v1025, %v1030
  %1034 = vrot.lane.b32.xlu0 %v1032, 32
  %v1035 = vpop.permute.xlu0 %1034
  %v1037 = vadd.f32 %v1027, %v1035
  %v1038 = vtanh.pop %v1037
  %1040 = vrot.lane.b32.xlu0 %v1038, 32
  %v1041 = vpop.permute.xlu0 %1040
  %v1043 = vmul.f32 %v1025, %v1041
  %v1044 = vpack.c.bf16 %v1043, %v1043
  %v1045 = vadd.f32 %v970, %v1043
  %v1046 = vmax.f32 %v971, %v1043
  %v1047 = vld [vmem:[#allocation2 + $0x18] sm:$0xff]
  %1049 = vrot.lane.b32.xlu0 %v1044, 64
  %v1050 = vpop.permute.xlu0 %1049
  %v1052 = vsel %vm174, %v1050, 0
  %1054 = vmatprep.subr.bf16.mxu0 0
  %1055 = vmatpush1.bf16.msra.mxu0 %v893
  %1056 = vmatprep.subr.bf16.mxu0 0
  %1057 = vmatpush1.bf16.msra.mxu0 %v894
  %1058 = vmatprep.subr.bf16.mxu0 0
  %1059 = vmatpush1.bf16.msra.mxu0 0
  %1060 = vmatprep.subr.bf16.mxu0 0
  %1061 = vmatpush1.bf16.msra.mxu0 0
  %1062 = vmatprep.subr.bf16.mxu0 0
  %1063 = vmatpush1.bf16.msra.mxu0 0
  %1064 = vmatprep.subr.bf16.mxu0 0
  %1065 = vmatpush1.bf16.msra.mxu0 0
  %1066 = vmatprep.subr.bf16.mxu0 0
  %1067 = vmatpush1.bf16.msra.mxu0 0
  %1068 = vmatprep.subr.bf16.mxu0 0
  %1069 = vmatpush1.bf16.msra.mxu0 0
  %1070 = vmatprep.subr.bf16.mxu0 0
  %1071 = vmatpush1.bf16.msra.mxu0 0
  %1072 = vmatprep.subr.bf16.mxu0 0
  %1073 = vmatpush1.bf16.msra.mxu0 0
  %1074 = vmatprep.subr.bf16.mxu0 0
  %1075 = vmatpush1.bf16.msra.mxu0 0
  %1076 = vmatprep.subr.bf16.mxu0 0
  %1077 = vmatpush1.bf16.msra.mxu0 0
  %1078 = vmatprep.subr.bf16.mxu0 0
  %1079 = vmatpush1.bf16.msra.mxu0 0
  %1080 = vmatprep.subr.bf16.mxu0 0
  %1081 = vmatpush1.bf16.msra.mxu0 0
  %1082 = vmatprep.subr.bf16.mxu0 0
  %1083 = vmatpush1.bf16.msra.mxu0 0
  %1084 = vmatprep.subr.bf16.mxu0 0
  %1085 = vmatpush1.bf16.msra.mxu0 0
  %1086 = vmatprep.mubr.bf16.mxu0 0
  %1087 = vmatmul.mubr.bf16.gmra.mrb[0].mxu0 %v1052
  %v1088 = vpop.f32.mrb[0].mxu0
  %v1089 = vadd.f32 0.0, %v1088
  %v1090 = vpop.f32.mrb[0].mxu0
  %v1091 = vpop.f32.mrb[0].mxu0
  %v1092 = vpop.f32.mrb[0].mxu0
  %1093 = vdwg.mxu0
  %v1094 = vadd.f32 %v1047, %v1089
  %v1095 = vxor.u32 %v1094, 2147483648
  %v1096 = vmul.f32 %v1095, 1.442695
  %v1097 = vpow.pop %v1096
  %v1098 = vadd.f32 %v1097, 1.0
  %v1099 = vrcp.pop %v1098
  %v1100 = vmul.f32 1.0, %v1099
  %v1101 = vtanh.pop %v1094
  %v1102 = vmul.f32 %v1100, %v1037
  %1104 = vrot.lane.b32.xlu0 %v1101, 32
  %v1105 = vpop.permute.xlu0 %1104
  %v1107 = vmul.f32 %v1100, %v1105
  %1109 = vrot.lane.b32.xlu0 %v1107, 32
  %v1110 = vpop.permute.xlu0 %1109
  %v1112 = vadd.f32 %v1102, %v1110
  %v1113 = vtanh.pop %v1112
  %1115 = vrot.lane.b32.xlu0 %v1113, 32
  %v1116 = vpop.permute.xlu0 %1115
  %v1118 = vmul.f32 %v1100, %v1116
  %v1119 = vpack.c.bf16 %v1118, %v1118
  %v1120 = vadd.f32 %v1045, %v1118
  %v1121 = vmax.f32 %v1046, %v1118
  %v1122 = vld [vmem:[#allocation2 + $0x20] sm:$0xff]
  %1124 = vrot.lane.b32.xlu0 %v1119, 64
  %v1125 = vpop.permute.xlu0 %1124
  %v1127 = vsel %vm174, %v1125, 0
  %1129 = vmatprep.subr.bf16.mxu0 0
  %1130 = vmatpush1.bf16.msra.mxu0 %v893
  %1131 = vmatprep.subr.bf16.mxu0 0
  %1132 = vmatpush1.bf16.msra.mxu0 %v894
  %1133 = vmatprep.subr.bf16.mxu0 0
  %1134 = vmatpush1.bf16.msra.mxu0 0
  %1135 = vmatprep.subr.bf16.mxu0 0
  %1136 = vmatpush1.bf16.msra.mxu0 0
  %1137 = vmatprep.subr.bf16.mxu0 0
  %1138 = vmatpush1.bf16.msra.mxu0 0
  %1139 = vmatprep.subr.bf16.mxu0 0
  %1140 = vmatpush1.bf16.msra.mxu0 0
  %1141 = vmatprep.subr.bf16.mxu0 0
  %1142 = vmatpush1.bf16.msra.mxu0 0
  %1143 = vmatprep.subr.bf16.mxu0 0
  %1144 = vmatpush1.bf16.msra.mxu0 0
  %1145 = vmatprep.subr.bf16.mxu0 0
  %1146 = vmatpush1.bf16.msra.mxu0 0
  %1147 = vmatprep.subr.bf16.mxu0 0
  %1148 = vmatpush1.bf16.msra.mxu0 0
  %1149 = vmatprep.subr.bf16.mxu0 0
  %1150 = vmatpush1.bf16.msra.mxu0 0
  %1151 = vmatprep.subr.bf16.mxu0 0
  %1152 = vmatpush1.bf16.msra.mxu0 0
  %1153 = vmatprep.subr.bf16.mxu0 0
  %1154 = vmatpush1.bf16.msra.mxu0 0
  %1155 = vmatprep.subr.bf16.mxu0 0
  %1156 = vmatpush1.bf16.msra.mxu0 0
  %1157 = vmatprep.subr.bf16.mxu0 0
  %1158 = vmatpush1.bf16.msra.mxu0 0
  %1159 = vmatprep.subr.bf16.mxu0 0
  %1160 = vmatpush1.bf16.msra.mxu0 0
  %1161 = vmatprep.mubr.bf16.mxu0 0
  %1162 = vmatmul.mubr.bf16.gmra.mrb[0].mxu0 %v1127
  %v1163 = vpop.f32.mrb[0].mxu0
  %v1164 = vadd.f32 0.0, %v1163
  %v1165 = vpop.f32.mrb[0].mxu0
  %v1166 = vpop.f32.mrb[0].mxu0
  %v1167 = vpop.f32.mrb[0].mxu0
  %1168 = vdwg.mxu0
  %v1169 = vadd.f32 %v1122, %v1164
  %v1170 = vxor.u32 %v1169, 2147483648
  %v1171 = vmul.f32 %v1170, 1.442695
  %v1172 = vpow.pop %v1171
  %v1173 = vadd.f32 %v1172, 1.0
  %v1174 = vrcp.pop %v1173
  %v1175 = vmul.f32 1.0, %v1174
  %v1176 = vtanh.pop %v1169
  %v1177 = vmul.f32 %v1175, %v1112
  %1179 = vrot.lane.b32.xlu0 %v1176, 32
  %v1180 = vpop.permute.xlu0 %1179
  %v1182 = vmul.f32 %v1175, %v1180
  %1184 = vrot.lane.b32.xlu0 %v1182, 32
  %v1185 = vpop.permute.xlu0 %1184
  %v1187 = vadd.f32 %v1177, %v1185
  %v1188 = vtanh.pop %v1187
  %1190 = vrot.lane.b32.xlu0 %v1188, 32
  %v1191 = vpop.permute.xlu0 %1190
  %v1193 = vmul.f32 %v1175, %v1191
  %v1194 = vpack.c.bf16 %v1193, %v1193
  %v1195 = vadd.f32 %v1120, %v1193
  %v1196 = vmax.f32 %v1121, %v1193
  %v1197 = vld [vmem:[#allocation2 + $0x28] sm:$0xff]
  %1199 = vrot.lane.b32.xlu0 %v1194, 64
  %v1200 = vpop.permute.xlu0 %1199
  %v1202 = vsel %vm174, %v1200, 0
  %1204 = vmatprep.subr.bf16.mxu0 0
  %1205 = vmatpush1.bf16.msra.mxu0 %v893
  %1206 = vmatprep.subr.bf16.mxu0 0
  %1207 = vmatpush1.bf16.msra.mxu0 %v894
  %1208 = vmatprep.subr.bf16.mxu0 0
  %1209 = vmatpush1.bf16.msra.mxu0 0
  %1210 = vmatprep.subr.bf16.mxu0 0
  %1211 = vmatpush1.bf16.msra.mxu0 0
  %1212 = vmatprep.subr.bf16.mxu0 0
  %1213 = vmatpush1.bf16.msra.mxu0 0
  %1214 = vmatprep.subr.bf16.mxu0 0
  %1215 = vmatpush1.bf16.msra.mxu0 0
  %1216 = vmatprep.subr.bf16.mxu0 0
  %1217 = vmatpush1.bf16.msra.mxu0 0
  %1218 = vmatprep.subr.bf16.mxu0 0
  %1219 = vmatpush1.bf16.msra.mxu0 0
  %1220 = vmatprep.subr.bf16.mxu0 0
  %1221 = vmatpush1.bf16.msra.mxu0 0
  %1222 = vmatprep.subr.bf16.mxu0 0
  %1223 = vmatpush1.bf16.msra.mxu0 0
  %1224 = vmatprep.subr.bf16.mxu0 0
  %1225 = vmatpush1.bf16.msra.mxu0 0
  %1226 = vmatprep.subr.bf16.mxu0 0
  %1227 = vmatpush1.bf16.msra.mxu0 0
  %1228 = vmatprep.subr.bf16.mxu0 0
  %1229 = vmatpush1.bf16.msra.mxu0 0
  %1230 = vmatprep.subr.bf16.mxu0 0
  %1231 = vmatpush1.bf16.msra.mxu0 0
  %1232 = vmatprep.subr.bf16.mxu0 0
  %1233 = vmatpush1.bf16.msra.mxu0 0
  %1234 = vmatprep.subr.bf16.mxu0 0
  %1235 = vmatpush1.bf16.msra.mxu0 0
  %1236 = vmatprep.mubr.bf16.mxu0 0
  %1237 = vmatmul.mubr.bf16.gmra.mrb[0].mxu0 %v1202
  %v1238 = vpop.f32.mrb[0].mxu0
  %v1239 = vadd.f32 0.0, %v1238
  %v1240 = vpop.f32.mrb[0].mxu0
  %v1241 = vpop.f32.mrb[0].mxu0
  %v1242 = vpop.f32.mrb[0].mxu0
  %1243 = vdwg.mxu0
  %v1244 = vadd.f32 %v1197, %v1239
  %v1245 = vxor.u32 %v1244, 2147483648
  %v1246 = vmul.f32 %v1245, 1.442695
  %v1247 = vpow.pop %v1246
  %v1248 = vadd.f32 %v1247, 1.0
  %v1249 = vrcp.pop %v1248
  %v1250 = vmul.f32 1.0, %v1249
  %v1251 = vtanh.pop %v1244
  %v1252 = vmul.f32 %v1250, %v1187
  %1254 = vrot.lane.b32.xlu0 %v1251, 32
  %v1255 = vpop.permute.xlu0 %1254
  %v1257 = vmul.f32 %v1250, %v1255
  %1259 = vrot.lane.b32.xlu0 %v1257, 32
  %v1260 = vpop.permute.xlu0 %1259
  %v1262 = vadd.f32 %v1252, %v1260
  %v1263 = vtanh.pop %v1262
  %1265 = vrot.lane.b32.xlu0 %v1263, 32
  %v1266 = vpop.permute.xlu0 %1265
  %v1268 = vmul.f32 %v1250, %v1266
  %v1269 = vpack.c.bf16 %v1268, %v1268
  %v1270 = vadd.f32 %v1195, %v1268
  %v1271 = vmax.f32 %v1196, %v1268
  %v1272 = vld [vmem:[#allocation2 + $0x30] sm:$0xff]
  %1274 = vrot.lane.b32.xlu0 %v1269, 64
  %v1275 = vpop.permute.xlu0 %1274
  %v1277 = vsel %vm174, %v1275, 0
  %1279 = vmatprep.subr.bf16.mxu0 0
  %1280 = vmatpush1.bf16.msra.mxu0 %v893
  %1281 = vmatprep.subr.bf16.mxu0 0
  %1282 = vmatpush1.bf16.msra.mxu0 %v894
  %1283 = vmatprep.subr.bf16.mxu0 0
  %1284 = vmatpush1.bf16.msra.mxu0 0
  %1285 = vmatprep.subr.bf16.mxu0 0
  %1286 = vmatpush1.bf16.msra.mxu0 0
  %1287 = vmatprep.subr.bf16.mxu0 0
  %1288 = vmatpush1.bf16.msra.mxu0 0
  %1289 = vmatprep.subr.bf16.mxu0 0
  %1290 = vmatpush1.bf16.msra.mxu0 0
  %1291 = vmatprep.subr.bf16.mxu0 0
  %1292 = vmatpush1.bf16.msra.mxu0 0
  %1293 = vmatprep.subr.bf16.mxu0 0
  %1294 = vmatpush1.bf16.msra.mxu0 0
  %1295 = vmatprep.subr.bf16.mxu0 0
  %1296 = vmatpush1.bf16.msra.mxu0 0
  %1297 = vmatprep.subr.bf16.mxu0 0
  %1298 = vmatpush1.bf16.msra.mxu0 0
  %1299 = vmatprep.subr.bf16.mxu0 0
  %1300 = vmatpush1.bf16.msra.mxu0 0
  %1301 = vmatprep.subr.bf16.mxu0 0
  %1302 = vmatpush1.bf16.msra.mxu0 0
  %1303 = vmatprep.subr.bf16.mxu0 0
  %1304 = vmatpush1.bf16.msra.mxu0 0
  %1305 = vmatprep.subr.bf16.mxu0 0
  %1306 = vmatpush1.bf16.msra.mxu0 0
  %1307 = vmatprep.subr.bf16.mxu0 0
  %1308 = vmatpush1.bf16.msra.mxu0 0
  %1309 = vmatprep.subr.bf16.mxu0 0
  %1310 = vmatpush1.bf16.msra.mxu0 0
  %1311 = vmatprep.mubr.bf16.mxu0 0
  %1312 = vmatmul.mubr.bf16.gmra.mrb[0].mxu0 %v1277
  %v1313 = vpop.f32.mrb[0].mxu0
  %v1314 = vadd.f32 0.0, %v1313
  %v1315 = vpop.f32.mrb[0].mxu0
  %v1316 = vpop.f32.mrb[0].mxu0
  %v1317 = vpop.f32.mrb[0].mxu0
  %1318 = vdwg.mxu0
  %v1319 = vadd.f32 %v1272, %v1314
  %v1320 = vxor.u32 %v1319, 2147483648
  %v1321 = vmul.f32 %v1320, 1.442695
  %v1322 = vpow.pop %v1321
  %v1323 = vadd.f32 %v1322, 1.0
  %v1324 = vrcp.pop %v1323
  %v1325 = vmul.f32 1.0, %v1324
  %v1326 = vtanh.pop %v1319
  %v1327 = vmul.f32 %v1325, %v1262
  %1329 = vrot.lane.b32.xlu0 %v1326, 32
  %v1330 = vpop.permute.xlu0 %1329
  %v1332 = vmul.f32 %v1325, %v1330
  %1334 = vrot.lane.b32.xlu0 %v1332, 32
  %v1335 = vpop.permute.xlu0 %1334
  %v1337 = vadd.f32 %v1327, %v1335
  %v1338 = vtanh.pop %v1337
  %1340 = vrot.lane.b32.xlu0 %v1338, 32
  %v1341 = vpop.permute.xlu0 %1340
  %v1343 = vmul.f32 %v1325, %v1341
  %v1344 = vpack.c.bf16 %v1343, %v1343
  %v1345 = vadd.f32 %v1270, %v1343
  %v1346 = vmax.f32 %v1271, %v1343
  %v1347 = vld [vmem:[#allocation2 + $0x38] sm:$0xff]
  %1349 = vrot.lane.b32.xlu0 %v1344, 64
  %v1350 = vpop.permute.xlu0 %1349
  %v1352 = vsel %vm174, %v1350, 0
  %1354 = vmatprep.subr.bf16.mxu0 0
  %1355 = vmatpush1.bf16.msra.mxu0 %v893
  %1356 = vmatprep.subr.bf16.mxu0 0
  %1357 = vmatpush1.bf16.msra.mxu0 %v894
  %1358 = vmatprep.subr.bf16.mxu0 0
  %1359 = vmatpush1.bf16.msra.mxu0 0
  %1360 = vmatprep.subr.bf16.mxu0 0
  %1361 = vmatpush1.bf16.msra.mxu0 0
  %1362 = vmatprep.subr.bf16.mxu0 0
  %1363 = vmatpush1.bf16.msra.mxu0 0
  %1364 = vmatprep.subr.bf16.mxu0 0
  %1365 = vmatpush1.bf16.msra.mxu0 0
  %1366 = vmatprep.subr.bf16.mxu0 0
  %1367 = vmatpush1.bf16.msra.mxu0 0
  %1368 = vmatprep.subr.bf16.mxu0 0
  %1369 = vmatpush1.bf16.msra.mxu0 0
  %1370 = vmatprep.subr.bf16.mxu0 0
  %1371 = vmatpush1.bf16.msra.mxu0 0
  %1372 = vmatprep.subr.bf16.mxu0 0
  %1373 = vmatpush1.bf16.msra.mxu0 0
  %1374 = vmatprep.subr.bf16.mxu0 0
  %1375 = vmatpush1.bf16.msra.mxu0 0
  %1376 = vmatprep.subr.bf16.mxu0 0
  %1377 = vmatpush1.bf16.msra.mxu0 0
  %1378 = vmatprep.subr.bf16.mxu0 0
  %1379 = vmatpush1.bf16.msra.mxu0 0
  %1380 = vmatprep.subr.bf16.mxu0 0
  %1381 = vmatpush1.bf16.msra.mxu0 0
  %1382 = vmatprep.subr.bf16.mxu0 0
  %1383 = vmatpush1.bf16.msra.mxu0 0
  %1384 = vmatprep.subr.bf16.mxu0 0
  %1385 = vmatpush1.bf16.msra.mxu0 0
  %1386 = vmatprep.mubr.bf16.mxu0 0
  %1387 = vmatmul.mubr.bf16.gmra.mrb[0].mxu0 %v1352
  %v1388 = vpop.f32.mrb[0].mxu0
  %v1389 = vadd.f32 0.0, %v1388
  %v1390 = vpop.f32.mrb[0].mxu0
  %v1391 = vpop.f32.mrb[0].mxu0
  %v1392 = vpop.f32.mrb[0].mxu0
  %1393 = vdwg.mxu0
  %v1394 = vadd.f32 %v1347, %v1389
  %v1395 = vxor.u32 %v1394, 2147483648
  %v1396 = vmul.f32 %v1395, 1.442695
  %v1397 = vpow.pop %v1396
  %v1398 = vadd.f32 %v1397, 1.0
  %v1399 = vrcp.pop %v1398
  %v1400 = vmul.f32 1.0, %v1399
  %v1401 = vtanh.pop %v1394
  %v1402 = vmul.f32 %v1400, %v1337
  %1404 = vrot.lane.b32.xlu0 %v1401, 32
  %v1405 = vpop.permute.xlu0 %1404
  %v1407 = vmul.f32 %v1400, %v1405
  %1409 = vrot.lane.b32.xlu0 %v1407, 32
  %v1410 = vpop.permute.xlu0 %1409
  %v1412 = vadd.f32 %v1402, %v1410
  %v1413 = vtanh.pop %v1412
  %1415 = vrot.lane.b32.xlu0 %v1413, 32
  %v1416 = vpop.permute.xlu0 %1415
  %v1418 = vmul.f32 %v1400, %v1416
  %v1419 = vadd.f32 %v1345, %v1418
  %v1420 = vmax.f32 %v1346, %v1418
  %v1421 = vld [vmem:[%s7] sm:$0xff]
  %v1422 = vld [vmem:[%s7 + $0x8] sm:$0xff]
  %v1423 = vld [vmem:[%s7 + $0x10] sm:$0xff]
  %v1424 = vld [vmem:[%s7 + $0x18] sm:$0xff]
  %v1425 = vld [vmem:[%s8] sm:$0xff]
  %v1426 = vld [vmem:[%s8 + $0x8] sm:$0xff]
  %v1427 = vld [vmem:[%s8 + $0x10] sm:$0xff]
  %v1428 = vld [vmem:[%s8 + $0x18] sm:$0xff]
  %1430 = vrot.lane.b32.xlu0 %v1420, 64
  %v1431 = vpop.permute.xlu0 %1430
  %v1432 = vsel %vm174, %v1431, 0
  %1434 = vmatprep.subr.mxu0 0.0
  %1435 = vmatpush1.msra.mxu0 %v1425
  %1436 = vmatprep.subr.mxu0 0.0
  %1437 = vmatpush1.msra.mxu0 %v1426
  %1438 = vmatprep.subr.mxu0 0.0
  %1439 = vmatpush1.msra.mxu0 %v1427
  %1440 = vmatprep.subr.mxu0 0.0
  %1441 = vmatpush1.msra.mxu0 %v1428
  %1442 = vmatprep.subr.mxu0 0.0
  %1443 = vmatpush1.msra.mxu0 0.0
  %1444 = vmatprep.subr.mxu0 0.0
  %1445 = vmatpush1.msra.mxu0 0.0
  %1446 = vmatprep.subr.mxu0 0.0
  %1447 = vmatpush1.msra.mxu0 0.0
  %1448 = vmatprep.subr.mxu0 0.0
  %1449 = vmatpush1.msra.mxu0 0.0
  %1450 = vmatprep.subr.mxu0 0.0
  %1451 = vmatpush1.msra.mxu0 0.0
  %1452 = vmatprep.subr.mxu0 0.0
  %1453 = vmatpush1.msra.mxu0 0.0
  %1454 = vmatprep.subr.mxu0 0.0
  %1455 = vmatpush1.msra.mxu0 0.0
  %1456 = vmatprep.subr.mxu0 0.0
  %1457 = vmatpush1.msra.mxu0 0.0
  %1458 = vmatprep.subr.mxu0 0.0
  %1459 = vmatpush1.msra.mxu0 0.0
  %1460 = vmatprep.subr.mxu0 0.0
  %1461 = vmatpush1.msra.mxu0 0.0
  %1462 = vmatprep.subr.mxu0 0.0
  %1463 = vmatpush1.msra.mxu0 0.0
  %1464 = vmatprep.subr.mxu0 0.0
  %1465 = vmatpush1.msra.mxu0 0.0
  %1466 = vmatprep.subr.mxu0 0.0
  %1467 = vmatpush1.msra.mxu0 0.0
  %1468 = vmatprep.subr.mxu0 0.0
  %1469 = vmatpush1.msra.mxu0 0.0
  %1470 = vmatprep.subr.mxu0 0.0
  %1471 = vmatpush1.msra.mxu0 0.0
  %1472 = vmatprep.subr.mxu0 0.0
  %1473 = vmatpush1.msra.mxu0 0.0
  %1474 = vmatprep.subr.mxu0 0.0
  %1475 = vmatpush1.msra.mxu0 0.0
  %1476 = vmatprep.subr.mxu0 0.0
  %1477 = vmatpush1.msra.mxu0 0.0
  %1478 = vmatprep.subr.mxu0 0.0
  %1479 = vmatpush1.msra.mxu0 0.0
  %1480 = vmatprep.subr.mxu0 0.0
  %1481 = vmatpush1.msra.mxu0 0.0
  %1482 = vmatprep.subr.mxu0 0.0
  %1483 = vmatpush1.msra.mxu0 0.0
  %1484 = vmatprep.subr.mxu0 0.0
  %1485 = vmatpush1.msra.mxu0 0.0
  %1486 = vmatprep.subr.mxu0 0.0
  %1487 = vmatpush1.msra.mxu0 0.0
  %1488 = vmatprep.subr.mxu0 0.0
  %1489 = vmatpush1.msra.mxu0 0.0
  %1490 = vmatprep.subr.mxu0 0.0
  %1491 = vmatpush1.msra.mxu0 0.0
  %1492 = vmatprep.subr.mxu0 0.0
  %1493 = vmatpush1.msra.mxu0 0.0
  %1494 = vmatprep.subr.mxu0 0.0
  %1495 = vmatpush1.msra.mxu0 0.0
  %1496 = vmatprep.subr.mxu0 0.0
  %1497 = vmatpush1.msra.mxu0 0.0
  %1498 = vmatprep.mubr.f32.mxu0 0.0
  %1499 = vmatmul.mubr.f32.gmra.mrb[0].mxu0 %v1432
  %v1500 = vpop.f32.mrb[0].mxu0
  %v1501 = vadd.f32 0.0, %v1500
  %v1502 = vpop.f32.mrb[0].mxu0
  %1503 = vdwg.mxu0
  %1505 = vrot.lane.b32.xlu0 %v1419, 64
  %v1506 = vpop.permute.xlu0 %1505
  %v1507 = vsel %vm174, %v1506, 0
  %1509 = vmatprep.subr.mxu0 0.0
  %1510 = vmatpush1.msra.mxu0 %v1421
  %1511 = vmatprep.subr.mxu0 0.0
  %1512 = vmatpush1.msra.mxu0 %v1422
  %1513 = vmatprep.subr.mxu0 0.0
  %1514 = vmatpush1.msra.mxu0 %v1423
  %1515 = vmatprep.subr.mxu0 0.0
  %1516 = vmatpush1.msra.mxu0 %v1424
  %1517 = vmatprep.subr.mxu0 0.0
  %1518 = vmatpush1.msra.mxu0 0.0
  %1519 = vmatprep.subr.mxu0 0.0
  %1520 = vmatpush1.msra.mxu0 0.0
  %1521 = vmatprep.subr.mxu0 0.0
  %1522 = vmatpush1.msra.mxu0 0.0
  %1523 = vmatprep.subr.mxu0 0.0
  %1524 = vmatpush1.msra.mxu0 0.0
  %1525 = vmatprep.subr.mxu0 0.0
  %1526 = vmatpush1.msra.mxu0 0.0
  %1527 = vmatprep.subr.mxu0 0.0
  %1528 = vmatpush1.msra.mxu0 0.0
  %1529 = vmatprep.subr.mxu0 0.0
  %1530 = vmatpush1.msra.mxu0 0.0
  %1531 = vmatprep.subr.mxu0 0.0
  %1532 = vmatpush1.msra.mxu0 0.0
  %1533 = vmatprep.subr.mxu0 0.0
  %1534 = vmatpush1.msra.mxu0 0.0
  %1535 = vmatprep.subr.mxu0 0.0
  %1536 = vmatpush1.msra.mxu0 0.0
  %1537 = vmatprep.subr.mxu0 0.0
  %1538 = vmatpush1.msra.mxu0 0.0
  %1539 = vmatprep.subr.mxu0 0.0
  %1540 = vmatpush1.msra.mxu0 0.0
  %1541 = vmatprep.subr.mxu0 0.0
  %1542 = vmatpush1.msra.mxu0 0.0
  %1543 = vmatprep.subr.mxu0 0.0
  %1544 = vmatpush1.msra.mxu0 0.0
  %1545 = vmatprep.subr.mxu0 0.0
  %1546 = vmatpush1.msra.mxu0 0.0
  %1547 = vmatprep.subr.mxu0 0.0
  %1548 = vmatpush1.msra.mxu0 0.0
  %1549 = vmatprep.subr.mxu0 0.0
  %1550 = vmatpush1.msra.mxu0 0.0
  %1551 = vmatprep.subr.mxu0 0.0
  %1552 = vmatpush1.msra.mxu0 0.0
  %1553 = vmatprep.subr.mxu0 0.0
  %1554 = vmatpush1.msra.mxu0 0.0
  %1555 = vmatprep.subr.mxu0 0.0
  %1556 = vmatpush1.msra.mxu0 0.0
  %1557 = vmatprep.subr.mxu0 0.0
  %1558 = vmatpush1.msra.mxu0 0.0
  %1559 = vmatprep.subr.mxu0 0.0
  %1560 = vmatpush1.msra.mxu0 0.0
  %1561 = vmatprep.subr.mxu0 0.0
  %1562 = vmatpush1.msra.mxu0 0.0
  %1563 = vmatprep.subr.mxu0 0.0
  %1564 = vmatpush1.msra.mxu0 0.0
  %1565 = vmatprep.subr.mxu0 0.0
  %1566 = vmatpush1.msra.mxu0 0.0
  %1567 = vmatprep.subr.mxu0 0.0
  %1568 = vmatpush1.msra.mxu0 0.0
  %1569 = vmatprep.subr.mxu0 0.0
  %1570 = vmatpush1.msra.mxu0 0.0
  %1571 = vmatprep.subr.mxu0 0.0
  %1572 = vmatpush1.msra.mxu0 0.0
  %1573 = vmatprep.mubr.f32.mxu0 0.0
  %1574 = vmatmul.mubr.f32.gmra.mrb[0].mxu0 %v1507
  %v1575 = vpop.f32.mrb[0].mxu0
  %v1576 = vadd.f32 %v1501, %v1575
  %v1577 = vpop.f32.mrb[0].mxu0
  %1578 = vdwg.mxu0
  %v1579 = vld [vmem:[%s9] sm:$0x1]
  %v1581 = vlaneseq
  %v1582 = vshrl.u32 %v1581, 7
  %v1583 = vsub.s32 0, %v1582
  %v1584 = vrot.slane %v1579, %v1583
  %v1586 = vadd.f32 %v1576, %v1584
  %vm1587 = vcmask 97280
  %1588 = vst.msk [vmem:[%s10] sm:$0xff] %vm1587, %v1586
  // Predicated region
  $region42: #{lstm_baseline_forward.1} parent=0 // pred_check
    _
  $region43: #{lstm_baseline_forward.1} parent=0 // pred_check_branch
    %1590 = sbr.rel (0) target = $region45
  $region44: #{lstm_baseline_forward.1} parent=0 // pred_region
    _
  $region45: #{lstm_baseline_forward.1} parent=0 // pred_fallthru
    _
  // Predicated region
  $region46: #{lstm_baseline_forward.1} parent=0 // pred_check
    _
  $region47: #{lstm_baseline_forward.1} parent=0 // pred_check_branch
    %1592 = sbr.rel (0) target = $region49
  $region48: #{lstm_baseline_forward.1} parent=0 // pred_region
    _
  $region49: #{lstm_baseline_forward.1} parent=0 // pred_fallthru
    _

</llo_original>
